<compile_context>
chip_gen: v7x
topology: tpu7x:2x2x1
jax: 0.10.0
libtpu: 0.0.40
codegen_flags: <defaults>
</compile_context>

<pallas_src>
import math
import functools

import jax
import jax.numpy as jnp
from jax.experimental import pallas as pl
from jax.experimental.pallas import tpu as pltpu


def _round_up(x, m):
    return (x + m - 1) // m * m


# ----------------------------- reference positional embedder -------------------------
def positional_embed(x, multires):
    """IDR-style embedder: [x, sin(2^k x), cos(2^k x)] for k = 0..multires-1."""
    feats = [x]
    for i in range(multires):
        f = 2.0 ** i
        feats.append(jnp.sin(x * f))
        feats.append(jnp.cos(x * f))
    return jnp.concatenate(feats, axis=-1)


# ----------------------------- Pallas kernel ----------------------------------------
def _mdn_kernel(x_ref, p_ref, o_ref, *, multires, d_pad, out0,
                chunk_rows, layer_dims, layer_rows, bias_col, n_layers):
    """Fused positional-embedding + per-network MLP (batch on the lane axis).

    x_ref : (d_pad, bt)   raw points for this network / batch tile (rows >= d_in are zero)
    p_ref : (R, 128)      packed weights + biases for this network (8-row-aligned blocks)
    o_ref : (d_out_pad, bt)
    """
    x = x_ref[...]                                           # (d_pad, bt) f32

    # ---- layer 0: embedding chunks fused into the first matmul ---------------------
    r0 = chunk_rows[0]
    b0 = p_ref[r0:r0 + out0, bias_col:bias_col + 1]          # (out0, 1) -> lane broadcast
    w_id = p_ref[r0:r0 + out0, 0:d_pad]
    h = jnp.dot(w_id, x, preferred_element_type=jnp.float32) + b0

    if multires > 0:
        s = jnp.sin(x)                                       # EUP: only 2 transcendentals
        c = jnp.cos(x)
        for k in range(multires):
            if k > 0:
                # VPU double-angle recurrence: argument doubles each step (2^k x).
                s, c = 2.0 * s * c, 2.0 * c * c - 1.0
            rs = chunk_rows[1 + 2 * k]
            rc = chunk_rows[2 + 2 * k]
            ws = p_ref[rs:rs + out0, 0:d_pad]
            wc = p_ref[rc:rc + out0, 0:d_pad]
            h = h + jnp.dot(ws, s, preferred_element_type=jnp.float32)
            h = h + jnp.dot(wc, c, preferred_element_type=jnp.float32)

    if n_layers > 1:
        h = jnp.maximum(h, 0.0)                              # ReLU after hidden layer 0
    else:
        h = jnp.tanh(h)                                      # single-layer network

    # ---- remaining layers -----------------------------------------------------------
    for l, ((out_f, in_f), r) in enumerate(zip(layer_dims, layer_rows)):
        w = p_ref[r:r + out_f, 0:in_f]
        b = p_ref[r:r + out_f, bias_col:bias_col + 1]
        h = jnp.dot(w, h, preferred_element_type=jnp.float32) + b
        if l < len(layer_dims) - 1:
            h = jnp.maximum(h, 0.0)                          # ReLU on hidden layers
        else:
            h = jnp.tanh(h)                                  # Tanh on the last layer

    o_ref[...] = h.astype(o_ref.dtype)


# ----------------------------- parameter packing -------------------------------------
def _pack_params(weights, biases, d_in, multires, d_pad, d_out_pad):
    """Pack all layers into one (n, n_rows, 128) buffer per network.

    Layer 0's weight is split into (1 + 2*multires) per-chunk (out0, d_pad) row blocks so the
    kernel can fuse the embedding into partial matmuls; later layers get one block each; the
    last layer is zero-padded to d_out_pad rows.  Biases live in column `bias_col`.
    """
    n = int(weights[0].shape[0])
    n_chunks = 1 + 2 * multires
    n_layers = len(weights)

    w0 = weights[0].astype(jnp.float32)                      # (n, out0, n_chunks * d_in)
    out0 = int(w0.shape[1])
    b0 = biases[0].astype(jnp.float32)
    w0 = w0.reshape(n, out0, n_chunks, d_in)
    if n_layers == 1:                                        # layer 0 is also the output layer
        w0 = jnp.zeros((n, d_out_pad, n_chunks, d_in), jnp.float32).at[:, :out0].set(w0)
        b0 = jnp.zeros((n, d_out_pad), jnp.float32).at[:, :out0].set(b0)
        out0 = d_out_pad
    # pad each chunk's input columns d_in -> d_pad with zeros (padded x rows are zero too)
    w0p = jnp.zeros((n, out0, n_chunks, d_pad), jnp.float32).at[..., :d_in].set(w0)

    blocks = [[w0p[:, :, k, :], b0 if k == 0 else None] for k in range(n_chunks)]
    for l in range(1, n_layers):
        w = weights[l].astype(jnp.float32)
        b = biases[l].astype(jnp.float32)
        if l == n_layers - 1:
            out_f, in_f = int(w.shape[1]), int(w.shape[2])
            w = jnp.zeros((n, d_out_pad, in_f), jnp.float32).at[:, :out_f].set(w)
            b = jnp.zeros((n, d_out_pad), jnp.float32).at[:, :out_f].set(b)
        blocks.append([w, b])

    rows, r = [], 0
    for w, _ in blocks:
        rows.append(r)
        r += _round_up(int(w.shape[1]), 8)
    n_rows = _round_up(r, 8)
    max_in = max(int(w.shape[2]) for w, _ in blocks)
    bias_col = max_in
    n_cols = _round_up(max_in + 1, 128)                      # lane-aligned param tile

    buf = jnp.zeros((n, n_rows, n_cols), jnp.float32)
    for (w, b), r0 in zip(blocks, rows):
        out_f, in_f = int(w.shape[1]), int(w.shape[2])
        buf = buf.at[:, r0:r0 + out_f, 0:in_f].set(w)
        if b is not None:
            buf = buf.at[:, r0:r0 + out_f, bias_col].set(b)

    chunk_rows = tuple(rows[:n_chunks])
    layer_rows = tuple(rows[n_chunks:])
    layer_dims = tuple((int(w.shape[1]), int(w.shape[2])) for w, _ in blocks[n_chunks:])
    return buf, out0, chunk_rows, layer_rows, layer_dims, bias_col


# ----------------------------- wrapper -----------------------------------------------
@functools.partial(jax.jit, static_argnames=("num_networks", "multires_view", "block_b"))
def multi_displacement_forward(x_points, weights, biases, num_networks,
                               multires_view, block_b=1024):
    """x_points: (N, d_in) float32; returns (N, d_out) displacements."""
    N, d_in = x_points.shape
    assert N % num_networks == 0
    B = N // num_networks
    d_out = int(weights[-1].shape[1])
    d_pad = _round_up(d_in, 8)
    d_out_pad = _round_up(d_out, 8)

    # Batch tile: multiple of 128, bounded (VMEM-safe on v7x), cdiv grid over padded batch.
    bt = max(128, min(int(block_b), _round_up(B, 128)))
    bt = _round_up(bt, 128)
    B_pad = _round_up(B, bt)
    grid_b = B_pad // bt

    # Batch-on-lanes staging (fused into this jit): (n, d_pad, B_pad), zero padding.
    xt = x_points.astype(jnp.float32).reshape(num_networks, B, d_in).transpose(0, 2, 1)
    x = jnp.zeros((num_networks, d_pad, B_pad), jnp.float32).at[:, :d_in, :B].set(xt)

    packed, out0, chunk_rows, layer_rows, layer_dims, bias_col = _pack_params(
        weights, biases, d_in, multires_view, d_pad, d_out_pad)
    n_rows, n_cols = int(packed.shape[1]), int(packed.shape[2])

    kernel = functools.partial(
        _mdn_kernel, multires=multires_view, d_pad=d_pad, out0=out0,
        chunk_rows=chunk_rows, layer_dims=layer_dims, layer_rows=layer_rows,
        bias_col=bias_col, n_layers=len(weights))

    y = pl.pallas_call(
        kernel,
        out_shape=jax.ShapeDtypeStruct((num_networks, d_out_pad, B_pad), jnp.float32),
        grid_spec=pltpu.PrefetchScalarGridSpec(
            num_scalar_prefetch=0,
            # network axis outer, batch tiles inner -> params DMA'd once per network;
            # both axes "parallel" so v7x's 2 TCs split the work.
            grid=(num_networks, grid_b),
            in_specs=[
                pl.BlockSpec((None, d_pad, bt), lambda n, j: (n, 0, j)),
                pl.BlockSpec((None, n_rows, n_cols), lambda n, j: (n, 0, 0)),
            ],
            out_specs=pl.BlockSpec((None, d_out_pad, bt), lambda n, j: (n, 0, j)),
        ),
        compiler_params=pltpu.CompilerParams(
            dimension_semantics=("parallel", "parallel")),
    )(x, packed)

    # (n, d_out_pad, B_pad) -> (N, d_out); tiny slice + transpose fused in this jit.
    return y[:, :d_out, :B].transpose(0, 2, 1).reshape(N, d_out)


# ----------------------------- deterministic init ------------------------------------
def init_params(key, num_networks, dims):
    """Matches MultiNetworkLinear.reset_parameters (kaiming_uniform relu gain, fan_in)."""
    weights, biases = [], []
    for l in range(len(dims) - 1):
        in_f, out_f = dims[l], dims[l + 1]
        key, kw, kb = jax.random.split(key, 3)
        gain = math.sqrt(2.0)                       # nonlinearity='relu'
        bound_w = math.sqrt(3.0) * gain / math.sqrt(in_f)
        w = jax.random.uniform(kw, (num_networks, out_f, in_f), jnp.float32,
                               -bound_w, bound_w)
        bound_b = 1.0 / math.sqrt(in_f)
        b = jax.random.uniform(kb, (num_networks, out_f), jnp.float32,
                               -bound_b, bound_b)
        weights.append(w)
        biases.append(b)
    return weights, biases


# ----------------------------- pure-JAX reference ------------------------------------
def ref_forward(x_points, weights, biases, num_networks, multires_view):
    x = positional_embed(x_points, multires_view)
    B = x.shape[0] // num_networks
    x = x.reshape(num_networks, B, -1)
    for l, (w, b) in enumerate(zip(weights, biases)):
        x = jnp.einsum("nbi,noi->nbo", x, w) + b[:, None, :]
        x = jnp.maximum(x, 0.0) if l < len(weights) - 1 else jnp.tanh(x)
    return x.reshape(-1, weights[-1].shape[1])


# ----------------------------- main ---------------------------------------------------
if __name__ == "__main__":
    key = jax.random.PRNGKey(0)
    kx, kp = jax.random.split(key)

    num_networks = 2
    d_in, d_out = 3, 3
    hidden_dims = [32, 32]
    multires_view = 4
    input_ch = d_in + 2 * multires_view * d_in          # 27 (dims[0] after embedding)
    dims = [input_ch] + hidden_dims + [d_out]           # [27, 32, 32, 3]

    weights, biases = init_params(kp, num_networks, dims)

    per_net_batch = 128                                 # small lane-dense batch tile
    N = num_networks * per_net_batch
    x_points = jax.random.uniform(kx, (N, d_in), jnp.float32, -1.0, 1.0)

    out = multi_displacement_forward(x_points, weights, biases,
                                     num_networks, multires_view)
    out = jax.block_until_ready(out)

    ref = ref_forward(x_points, weights, biases, num_networks, multires_view)
    assert out.shape == (N, d_out), out.shape
    max_err = float(jnp.max(jnp.abs(out - ref)))
    assert jnp.allclose(out, ref, atol=2e-3, rtol=2e-3), max_err

    print("KERNEL_OK")
</pallas_src>

<mosaic_0001>
module attributes {stable_mosaic.version = 11 : i64} {
  func.func @_mdn_kernel(%arg0: i32, %arg1: i32, %arg2: memref<1x8x128xf32, #tpu.memory_space<vmem>>, %arg3: memref<1x328x128xf32, #tpu.memory_space<vmem>>, %arg4: memref<1x8x128xf32, #tpu.memory_space<vmem>>) attributes {dimension_semantics = [#tpu.dimension_semantics<parallel>, #tpu.dimension_semantics<parallel>], iteration_bounds = array<i64: 2, 1>, scalar_prefetch = 0 : i64, scratch_operands = 0 : i64, tpu.core_type = #tpu.core_type<tc>, window_params = [{transform_indices = @transform_0, window_bounds = array<i64: 1, 8, 128>}, {transform_indices = @transform_1, window_bounds = array<i64: 1, 328, 128>}, {transform_indices = @transform_2, window_bounds = array<i64: 1, 8, 128>}]} {
    %c0 = arith.constant 0 : index
    %c0_0 = arith.constant 0 : index
    %c0_1 = arith.constant 0 : index
    %0 = vector.load %arg2[%c0, %c0_0, %c0_1] : memref<1x8x128xf32, #tpu.memory_space<vmem>>, vector<1x8x128xf32>
    %1 = vector.shape_cast %0 : vector<1x8x128xf32> to vector<8x128xf32>
    %c0_2 = arith.constant 0 : index
    %c0_3 = arith.constant 0 : index
    %c32 = arith.constant 32 : index
    %2 = vector.load %arg3[%c0_2, %c0_3, %c32] : memref<1x328x128xf32, #tpu.memory_space<vmem>>, vector<1x32x1xf32>
    %3 = vector.shape_cast %2 : vector<1x32x1xf32> to vector<32x1xf32>
    %c0_4 = arith.constant 0 : index
    %c0_5 = arith.constant 0 : index
    %c0_6 = arith.constant 0 : index
    %4 = vector.load %arg3[%c0_4, %c0_5, %c0_6] : memref<1x328x128xf32, #tpu.memory_space<vmem>>, vector<1x32x8xf32>
    %5 = vector.shape_cast %4 : vector<1x32x8xf32> to vector<32x8xf32>
    %cst = arith.constant dense<0.000000e+00> : vector<32x128xf32>
    %6 = tpu.matmul %5, %1, %cst {dimension_numbers = #tpu.dot_dimension_numbers<[1], [0], [0], [1], [0, 0, 1, 1], [], []>} : vector<32x8xf32>, vector<8x128xf32>, vector<32x128xf32> -> vector<32x128xf32>
    %7 = vector.broadcast %3 : vector<32x1xf32> to vector<32x128xf32>
    %8 = arith.addf %6, %7 : vector<32x128xf32>
    %9 = math.sin %1 : vector<8x128xf32>
    %10 = math.cos %1 : vector<8x128xf32>
    %c0_7 = arith.constant 0 : index
    %c32_8 = arith.constant 32 : index
    %c0_9 = arith.constant 0 : index
    %11 = vector.load %arg3[%c0_7, %c32_8, %c0_9] : memref<1x328x128xf32, #tpu.memory_space<vmem>>, vector<1x32x8xf32>
    %12 = vector.shape_cast %11 : vector<1x32x8xf32> to vector<32x8xf32>
    %c0_10 = arith.constant 0 : index
    %c64 = arith.constant 64 : index
    %c0_11 = arith.constant 0 : index
    %13 = vector.load %arg3[%c0_10, %c64, %c0_11] : memref<1x328x128xf32, #tpu.memory_space<vmem>>, vector<1x32x8xf32>
    %14 = vector.shape_cast %13 : vector<1x32x8xf32> to vector<32x8xf32>
    %cst_12 = arith.constant dense<0.000000e+00> : vector<32x128xf32>
    %15 = tpu.matmul %12, %9, %cst_12 {dimension_numbers = #tpu.dot_dimension_numbers<[1], [0], [0], [1], [0, 0, 1, 1], [], []>} : vector<32x8xf32>, vector<8x128xf32>, vector<32x128xf32> -> vector<32x128xf32>
    %16 = arith.addf %8, %15 : vector<32x128xf32>
    %cst_13 = arith.constant dense<0.000000e+00> : vector<32x128xf32>
    %17 = tpu.matmul %14, %10, %cst_13 {dimension_numbers = #tpu.dot_dimension_numbers<[1], [0], [0], [1], [0, 0, 1, 1], [], []>} : vector<32x8xf32>, vector<8x128xf32>, vector<32x128xf32> -> vector<32x128xf32>
    %18 = arith.addf %16, %17 : vector<32x128xf32>
    %cst_14 = arith.constant 2.000000e+00 : f32
    %19 = vector.broadcast %cst_14 : f32 to vector<8x128xf32>
    %20 = arith.mulf %19, %9 : vector<8x128xf32>
    %21 = arith.mulf %20, %10 : vector<8x128xf32>
    %cst_15 = arith.constant 2.000000e+00 : f32
    %22 = vector.broadcast %cst_15 : f32 to vector<8x128xf32>
    %23 = arith.mulf %22, %10 : vector<8x128xf32>
    %24 = arith.mulf %23, %10 : vector<8x128xf32>
    %cst_16 = arith.constant 1.000000e+00 : f32
    %25 = vector.broadcast %cst_16 : f32 to vector<8x128xf32>
    %26 = arith.subf %24, %25 : vector<8x128xf32>
    %c0_17 = arith.constant 0 : index
    %c96 = arith.constant 96 : index
    %c0_18 = arith.constant 0 : index
    %27 = vector.load %arg3[%c0_17, %c96, %c0_18] : memref<1x328x128xf32, #tpu.memory_space<vmem>>, vector<1x32x8xf32>
    %28 = vector.shape_cast %27 : vector<1x32x8xf32> to vector<32x8xf32>
    %c0_19 = arith.constant 0 : index
    %c128 = arith.constant 128 : index
    %c0_20 = arith.constant 0 : index
    %29 = vector.load %arg3[%c0_19, %c128, %c0_20] : memref<1x328x128xf32, #tpu.memory_space<vmem>>, vector<1x32x8xf32>
    %30 = vector.shape_cast %29 : vector<1x32x8xf32> to vector<32x8xf32>
    %cst_21 = arith.constant dense<0.000000e+00> : vector<32x128xf32>
    %31 = tpu.matmul %28, %21, %cst_21 {dimension_numbers = #tpu.dot_dimension_numbers<[1], [0], [0], [1], [0, 0, 1, 1], [], []>} : vector<32x8xf32>, vector<8x128xf32>, vector<32x128xf32> -> vector<32x128xf32>
    %32 = arith.addf %18, %31 : vector<32x128xf32>
    %cst_22 = arith.constant dense<0.000000e+00> : vector<32x128xf32>
    %33 = tpu.matmul %30, %26, %cst_22 {dimension_numbers = #tpu.dot_dimension_numbers<[1], [0], [0], [1], [0, 0, 1, 1], [], []>} : vector<32x8xf32>, vector<8x128xf32>, vector<32x128xf32> -> vector<32x128xf32>
    %34 = arith.addf %32, %33 : vector<32x128xf32>
    %cst_23 = arith.constant 2.000000e+00 : f32
    %35 = vector.broadcast %cst_23 : f32 to vector<8x128xf32>
    %36 = arith.mulf %35, %21 : vector<8x128xf32>
    %37 = arith.mulf %36, %26 : vector<8x128xf32>
    %cst_24 = arith.constant 2.000000e+00 : f32
    %38 = vector.broadcast %cst_24 : f32 to vector<8x128xf32>
    %39 = arith.mulf %38, %26 : vector<8x128xf32>
    %40 = arith.mulf %39, %26 : vector<8x128xf32>
    %cst_25 = arith.constant 1.000000e+00 : f32
    %41 = vector.broadcast %cst_25 : f32 to vector<8x128xf32>
    %42 = arith.subf %40, %41 : vector<8x128xf32>
    %c0_26 = arith.constant 0 : index
    %c160 = arith.constant 160 : index
    %c0_27 = arith.constant 0 : index
    %43 = vector.load %arg3[%c0_26, %c160, %c0_27] : memref<1x328x128xf32, #tpu.memory_space<vmem>>, vector<1x32x8xf32>
    %44 = vector.shape_cast %43 : vector<1x32x8xf32> to vector<32x8xf32>
    %c0_28 = arith.constant 0 : index
    %c192 = arith.constant 192 : index
    %c0_29 = arith.constant 0 : index
    %45 = vector.load %arg3[%c0_28, %c192, %c0_29] : memref<1x328x128xf32, #tpu.memory_space<vmem>>, vector<1x32x8xf32>
    %46 = vector.shape_cast %45 : vector<1x32x8xf32> to vector<32x8xf32>
    %cst_30 = arith.constant dense<0.000000e+00> : vector<32x128xf32>
    %47 = tpu.matmul %44, %37, %cst_30 {dimension_numbers = #tpu.dot_dimension_numbers<[1], [0], [0], [1], [0, 0, 1, 1], [], []>} : vector<32x8xf32>, vector<8x128xf32>, vector<32x128xf32> -> vector<32x128xf32>
    %48 = arith.addf %34, %47 : vector<32x128xf32>
    %cst_31 = arith.constant dense<0.000000e+00> : vector<32x128xf32>
    %49 = tpu.matmul %46, %42, %cst_31 {dimension_numbers = #tpu.dot_dimension_numbers<[1], [0], [0], [1], [0, 0, 1, 1], [], []>} : vector<32x8xf32>, vector<8x128xf32>, vector<32x128xf32> -> vector<32x128xf32>
    %50 = arith.addf %48, %49 : vector<32x128xf32>
    %cst_32 = arith.constant 2.000000e+00 : f32
    %51 = vector.broadcast %cst_32 : f32 to vector<8x128xf32>
    %52 = arith.mulf %51, %37 : vector<8x128xf32>
    %53 = arith.mulf %52, %42 : vector<8x128xf32>
    %cst_33 = arith.constant 2.000000e+00 : f32
    %54 = vector.broadcast %cst_33 : f32 to vector<8x128xf32>
    %55 = arith.mulf %54, %42 : vector<8x128xf32>
    %56 = arith.mulf %55, %42 : vector<8x128xf32>
    %cst_34 = arith.constant 1.000000e+00 : f32
    %57 = vector.broadcast %cst_34 : f32 to vector<8x128xf32>
    %58 = arith.subf %56, %57 : vector<8x128xf32>
    %c0_35 = arith.constant 0 : index
    %c224 = arith.constant 224 : index
    %c0_36 = arith.constant 0 : index
    %59 = vector.load %arg3[%c0_35, %c224, %c0_36] : memref<1x328x128xf32, #tpu.memory_space<vmem>>, vector<1x32x8xf32>
    %60 = vector.shape_cast %59 : vector<1x32x8xf32> to vector<32x8xf32>
    %c0_37 = arith.constant 0 : index
    %c256 = arith.constant 256 : index
    %c0_38 = arith.constant 0 : index
    %61 = vector.load %arg3[%c0_37, %c256, %c0_38] : memref<1x328x128xf32, #tpu.memory_space<vmem>>, vector<1x32x8xf32>
    %62 = vector.shape_cast %61 : vector<1x32x8xf32> to vector<32x8xf32>
    %cst_39 = arith.constant dense<0.000000e+00> : vector<32x128xf32>
    %63 = tpu.matmul %60, %53, %cst_39 {dimension_numbers = #tpu.dot_dimension_numbers<[1], [0], [0], [1], [0, 0, 1, 1], [], []>} : vector<32x8xf32>, vector<8x128xf32>, vector<32x128xf32> -> vector<32x128xf32>
    %64 = arith.addf %50, %63 : vector<32x128xf32>
    %cst_40 = arith.constant dense<0.000000e+00> : vector<32x128xf32>
    %65 = tpu.matmul %62, %58, %cst_40 {dimension_numbers = #tpu.dot_dimension_numbers<[1], [0], [0], [1], [0, 0, 1, 1], [], []>} : vector<32x8xf32>, vector<8x128xf32>, vector<32x128xf32> -> vector<32x128xf32>
    %66 = arith.addf %64, %65 : vector<32x128xf32>
    %cst_41 = arith.constant 0.000000e+00 : f32
    %67 = vector.broadcast %cst_41 : f32 to vector<32x128xf32>
    %68 = arith.maximumf %66, %67 : vector<32x128xf32>
    %c0_42 = arith.constant 0 : index
    %c288 = arith.constant 288 : index
    %c0_43 = arith.constant 0 : index
    %69 = vector.load %arg3[%c0_42, %c288, %c0_43] : memref<1x328x128xf32, #tpu.memory_space<vmem>>, vector<1x32x32xf32>
    %70 = vector.shape_cast %69 : vector<1x32x32xf32> to vector<32x32xf32>
    %c0_44 = arith.constant 0 : index
    %c288_45 = arith.constant 288 : index
    %c32_46 = arith.constant 32 : index
    %71 = vector.load %arg3[%c0_44, %c288_45, %c32_46] : memref<1x328x128xf32, #tpu.memory_space<vmem>>, vector<1x32x1xf32>
    %72 = vector.shape_cast %71 : vector<1x32x1xf32> to vector<32x1xf32>
    %cst_47 = arith.constant dense<0.000000e+00> : vector<32x128xf32>
    %73 = tpu.matmul %70, %68, %cst_47 {dimension_numbers = #tpu.dot_dimension_numbers<[1], [0], [0], [1], [0, 0, 1, 1], [], []>} : vector<32x32xf32>, vector<32x128xf32>, vector<32x128xf32> -> vector<32x128xf32>
    %74 = vector.broadcast %72 : vector<32x1xf32> to vector<32x128xf32>
    %75 = arith.addf %73, %74 : vector<32x128xf32>
    %cst_48 = arith.constant 0.000000e+00 : f32
    %76 = vector.broadcast %cst_48 : f32 to vector<32x128xf32>
    %77 = arith.maximumf %75, %76 : vector<32x128xf32>
    %c0_49 = arith.constant 0 : index
    %c320 = arith.constant 320 : index
    %c0_50 = arith.constant 0 : index
    %78 = vector.load %arg3[%c0_49, %c320, %c0_50] : memref<1x328x128xf32, #tpu.memory_space<vmem>>, vector<1x8x32xf32>
    %79 = vector.shape_cast %78 : vector<1x8x32xf32> to vector<8x32xf32>
    %c0_51 = arith.constant 0 : index
    %c320_52 = arith.constant 320 : index
    %c32_53 = arith.constant 32 : index
    %80 = vector.load %arg3[%c0_51, %c320_52, %c32_53] : memref<1x328x128xf32, #tpu.memory_space<vmem>>, vector<1x8x1xf32>
    %81 = vector.shape_cast %80 : vector<1x8x1xf32> to vector<8x1xf32>
    %cst_54 = arith.constant dense<0.000000e+00> : vector<8x128xf32>
    %82 = tpu.matmul %79, %77, %cst_54 {dimension_numbers = #tpu.dot_dimension_numbers<[1], [0], [0], [1], [0, 0, 1, 1], [], []>} : vector<8x32xf32>, vector<32x128xf32>, vector<8x128xf32> -> vector<8x128xf32>
    %83 = vector.broadcast %81 : vector<8x1xf32> to vector<8x128xf32>
    %84 = arith.addf %82, %83 : vector<8x128xf32>
    %85 = math.tanh %84 : vector<8x128xf32>
    %c0_55 = arith.constant 0 : index
    %c0_56 = arith.constant 0 : index
    %c0_57 = arith.constant 0 : index
    %86 = vector.load %arg4[%c0_55, %c0_56, %c0_57] : memref<1x8x128xf32, #tpu.memory_space<vmem>>, vector<1x8x128xf32>
    %87 = vector.shape_cast %86 : vector<1x8x128xf32> to vector<8x128xf32>
    %88 = vector.shape_cast %85 : vector<8x128xf32> to vector<1x8x128xf32>
    tpu.vector_store %arg4[%c0_55, %c0_56, %c0_57], %88 {strides = array<i32>} : memref<1x8x128xf32, #tpu.memory_space<vmem>>, vector<1x8x128xf32>,
    return
  }
  func.func @transform_0(%arg0: i32, %arg1: i32) -> (i32, i32, i32) {
    %c0_i32 = arith.constant 0 : i32
    %c0_i32_0 = arith.constant 0 : i32
    return %arg0, %c0_i32, %arg1 : i32, i32, i32
  }
  func.func @transform_1(%arg0: i32, %arg1: i32) -> (i32, i32, i32) {
    %c0_i32 = arith.constant 0 : i32
    %c0_i32_0 = arith.constant 0 : i32
    %c0_i32_1 = arith.constant 0 : i32
    return %arg0, %c0_i32, %c0_i32_0 : i32, i32, i32
  }
  func.func @transform_2(%arg0: i32, %arg1: i32) -> (i32, i32, i32) {
    %c0_i32 = arith.constant 0 : i32
    %c0_i32_0 = arith.constant 0 : i32
    return %arg0, %c0_i32, %arg1 : i32, i32, i32
  }
}

</mosaic_0001>

<llo_original>
// kernel: multi_displacement_forward.1
$region0: #{multi_displacement_forward.1}
  #allocation0 [shape = 'u32[]', space=smem, size = 0x4, offset = 0x4, fixed_abs, tag = 'smem constant byte address 0x4 - core index']
  #allocation1 [shape = 'u32[144,128]{1,0:T(1,128)}', space=vmem, size = 0x12000, scoped, tag = 'internal scratch']
  %s0 = inlined_call_operand.vmem [shape: f32[2,8,128], index: 0, kind: input, shape index: {}]
  %s1 = inlined_call_operand.vmem [shape: f32[2,328,128], index: 1, kind: input, shape index: {}]
  %s2 = inlined_call_operand.vmem [shape: f32[2,8,128], index: 2, kind: output, shape index: {}]
  %s3 = sld [smem:[#allocation0]]
  $region41: #{multi_displacement_forward.1} parent=0
    _
  %s5 = ssub.s32 1, %s3
  %s6 = scalar_select 0, %s5, %s3
  loop: start=0, step=1, limit=4
  $region2: #{multi_displacement_forward.1} parent=0 // loop_pre_header
    _
  $region3: #{multi_displacement_forward.1} parent=0 // loop_header
    %s8 = sphi 0, %s12
    %p9 = scmp.ge.s32.totalorder %s8, 4
    %s15 = sphi 0, %s27
    %s16 = sphi 0, %s23
    %s17 = sphi 0, %s15
    %s18 = sphi 0, %s16
    %s19 = sphi 0, %s17
    %s20 = sphi 0, %s18
    %s32 = sphi 0, %s34
    %s35 = sphi 0, %s32
    %s36 = sphi 0, %s35
    %s52 = sphi 0, %s36
    %s58 = sphi 0, %s60
    %s61 = sphi 0, %s58
    %s62 = sphi 0, %s61
    %s78 = sphi 0, %s62
    %s86 = sphi 0, %s88
    %s89 = sphi 0, %s86
    %s90 = sphi 0, %s89
    %s106 = sphi 0, %s90
  $region4: #{multi_displacement_forward.1} parent=0 // loop_header_branch
    %11 = sbr.rel (%p9) target = $region8
  $region5: #{multi_displacement_forward.1} parent=0 // loop_body
    %s13 = ssub.s32 %s8, 1
    %s14 = ssub.s32 %s8, 2
    %s21 = sadd.s32 1, %s16
    %p22 = scmp.ge.s32.totalorder %s21, 1
    %s23 = scalar_select %p22, 0, %s21
    %s24 = sadd.s32 1, %s15
    %s25 = scalar_select %p22, %s24, %s15
    %p26 = scmp.ge.s32.totalorder %s25, 2
    %s27 = scalar_select %p26, 0, %s25
    %s28 = ssub.s32 %s15, %s27
    %s29 = ssub.s32 %s16, %s23
    %s30 = sor.u32 %s28, %s29
    %p31 = scmp.eq.s32.totalorder %s30, 0
    %s33 = sadd.s32 %s32, 1
    %s34 = scalar_select %p31, %s32, %s33
    %p37 = pneg %p31
    %p38 = scmp.eq.s32.totalorder %s8, 1
    %p39 = por %p37, %p38
    %p40 = scmp.ne.s32.totalorder %s32, %s35
    %p41 = scmp.eq.s32.totalorder %s8, 0
    %p42 = por %p40, %p41
    %p43 = scmp.ne.s32.totalorder %s32, %s35
    %p44 = scmp.eq.s32.totalorder %s13, 1
    %p45 = por %p43, %p44
    %p46 = scmp.ne.s32.totalorder %s35, %s36
    %p47 = scmp.eq.s32.totalorder %s13, 0
    %p48 = por %p46, %p47
    %p49 = scmp.ne.s32.totalorder %s35, %s36
    %p50 = scmp.eq.s32.totalorder %s14, 1
    %p51 = por %p49, %p50
    %p53 = scmp.ne.s32.totalorder %s36, %s52
    %p54 = scmp.eq.s32.totalorder %s14, 0
    %p55 = por %p53, %p54
    %s56 = ssub.s32 %s15, %s27
    %p57 = scmp.eq.s32.totalorder %s56, 0
    %s59 = sadd.s32 %s58, 1
    %s60 = scalar_select %p57, %s58, %s59
    %p63 = pneg %p57
    %p64 = scmp.eq.s32.totalorder %s8, 1
    %p65 = por %p63, %p64
    %p66 = scmp.ne.s32.totalorder %s58, %s61
    %p67 = scmp.eq.s32.totalorder %s8, 0
    %p68 = por %p66, %p67
    %p69 = scmp.ne.s32.totalorder %s58, %s61
    %p70 = scmp.eq.s32.totalorder %s13, 1
    %p71 = por %p69, %p70
    %p72 = scmp.ne.s32.totalorder %s61, %s62
    %p73 = scmp.eq.s32.totalorder %s13, 0
    %p74 = por %p72, %p73
    %p75 = scmp.ne.s32.totalorder %s61, %s62
    %p76 = scmp.eq.s32.totalorder %s14, 1
    %p77 = por %p75, %p76
    %p79 = scmp.ne.s32.totalorder %s62, %s78
    %p80 = scmp.eq.s32.totalorder %s14, 0
    %p81 = por %p79, %p80
    %s82 = ssub.s32 %s15, %s27
    %s83 = ssub.s32 %s16, %s23
    %s84 = sor.u32 %s82, %s83
    %p85 = scmp.eq.s32.totalorder %s84, 0
    %s87 = sadd.s32 %s86, 1
    %s88 = scalar_select %p85, %s86, %s87
    %p91 = pneg %p85
    %p92 = scmp.eq.s32.totalorder %s8, 1
    %p93 = por %p91, %p92
    %p94 = scmp.ne.s32.totalorder %s86, %s89
    %p95 = scmp.eq.s32.totalorder %s8, 0
    %p96 = por %p94, %p95
    %p97 = scmp.ne.s32.totalorder %s86, %s89
    %p98 = scmp.eq.s32.totalorder %s13, 1
    %p99 = por %p97, %p98
    %p100 = scmp.ne.s32.totalorder %s89, %s90
    %p101 = scmp.eq.s32.totalorder %s13, 0
    %p102 = por %p100, %p101
    %p103 = scmp.ne.s32.totalorder %s89, %s90
    %p104 = scmp.eq.s32.totalorder %s14, 1
    %p105 = por %p103, %p104
    %p107 = scmp.ne.s32.totalorder %s90, %s106
    %p108 = scmp.eq.s32.totalorder %s14, 0
    %p109 = por %p107, %p108
    %p110 = scmp.le.s32.totalorder 1, %s8
    %p111 = scmp.lt.s32.totalorder %s8, 3
    %p112 = pnand %p110, %p111
    %p113 = pneg %p112
    // Predicated region
    $region9: #{multi_displacement_forward.1} parent=5 // pred_check
      _
    $region10: #{multi_displacement_forward.1} parent=5 // pred_check_branch
      %115 = sbr.rel (%p112) target = $region12
    $region11: #{multi_displacement_forward.1} parent=5 // pred_region
      %s116 = ssub.s32 %s8, 1
    $region12: #{multi_displacement_forward.1} parent=5 // pred_fallthru
      _
    %p117 = scmp.lt.s32.totalorder %s8, 2
    // Predicated region
    $region13: #{multi_displacement_forward.1} parent=5 // pred_check
      %p118 = pneg %p117
    $region14: #{multi_displacement_forward.1} parent=5 // pred_check_branch
      %120 = sbr.rel (%p118) target = $region16
    $region15: #{multi_displacement_forward.1} parent=5 // pred_region
      // Predicated region
      $region17: #{multi_displacement_forward.1} parent=15 // pred_check
        %p121 = pneg %p42
      $region18: #{multi_displacement_forward.1} parent=15 // pred_check_branch
        %123 = sbr.rel (%p121) target = $region20
      $region19: #{multi_displacement_forward.1} parent=15 // pred_region
        %p124 = scmp.lt.s32.totalorder %s15, 1
        %s125 = scalar_select %p124, %s15, 1
        %p126 = scmp.lt.s32.totalorder %s16, 0
        %s127 = scalar_select %p126, %s16, 0
        %s128 = sadd.s32 %s127, %s125
        %s129 = smul.addr %s128, 8
        %s130 = scalar_lea.vmem %s0, %s129
      $region20: #{multi_displacement_forward.1} parent=15 // pred_fallthru
        _
      // Predicated region
      $region21: #{multi_displacement_forward.1} parent=15 // pred_check
        %p131 = pneg %p68
      $region22: #{multi_displacement_forward.1} parent=15 // pred_check_branch
        %133 = sbr.rel (%p131) target = $region24
      $region23: #{multi_displacement_forward.1} parent=15 // pred_region
        %p134 = scmp.lt.s32.totalorder %s15, 1
        %s135 = scalar_select %p134, %s15, 1
        %s136 = smul.addr %s135, 41
        %s137 = smul.addr %s136, 8
        %s138 = scalar_lea.vmem %s1, %s137
      $region24: #{multi_displacement_forward.1} parent=15 // pred_fallthru
        _
    $region16: #{multi_displacement_forward.1} parent=5 // pred_fallthru
      _
    %p139 = scmp.le.s32.totalorder 1, %s8
    %p140 = scmp.lt.s32.totalorder %s8, 3
    %p141 = pnand %p139, %p140
    %p142 = pneg %p141
    // Predicated region
    $region25: #{multi_displacement_forward.1} parent=5 // pred_check
      _
    $region26: #{multi_displacement_forward.1} parent=5 // pred_check_branch
      %144 = sbr.rel (%p141) target = $region28
    $region27: #{multi_displacement_forward.1} parent=5 // pred_region
      %s145 = ssub.s32 %s8, 1
      %p146 = scmp.lt.s32.totalorder %s17, 1
      %s147 = scalar_select %p146, %s17, 1
      %p148 = scmp.lt.s32.totalorder %s18, 0
      %s149 = scalar_select %p148, %s18, 0
      %s150 = sadd.s32 %s149, %s147
      %s151 = smul.addr %s150, 8
      %s152 = scalar_lea.vmem %s0, %s151
      %p153 = pneg %p48
      %p154 = pneg %p45
      %p155 = scmp.lt.s32.totalorder %s17, 1
      %s156 = scalar_select %p155, %s17, 1
      %s157 = smul.addr %s156, 41
      %s158 = smul.addr %s157, 8
      %s159 = scalar_lea.vmem %s1, %s158
      %p160 = pneg %p74
      %p161 = pneg %p71
      %p162 = pneg %p102
      %p163 = pneg %p99
      %p164 = scmp.lt.s32.totalorder %s17, 1
      %s165 = scalar_select %p164, %s17, 1
      %p166 = scmp.lt.s32.totalorder %s18, 0
      %s167 = scalar_select %p166, %s18, 0
      %s168 = sadd.s32 %s167, %s165
      %s169 = smul.addr %s168, 8
      %s170 = scalar_lea.vmem %s2, %s169
      %p171 = scmp.lt.s32.totalorder %s17, 1
      %s172 = scalar_select %p171, %s17, 1
      %p173 = scmp.lt.s32.totalorder %s18, 0
      %s174 = scalar_select %p173, %s18, 0
      %s175 = sadd.s32 %s174, %s172
      %s176 = smul.addr %s175, 8
      %s177 = scalar_lea.vmem %s0, %s176
      %p178 = scmp.lt.s32.totalorder %s17, 1
      %s179 = scalar_select %p178, %s17, 1
      %s180 = smul.addr %s179, 41
      %s181 = smul.addr %s180, 8
      %s182 = scalar_lea.vmem %s1, %s181
      %p183 = scmp.lt.s32.totalorder %s17, 1
      %s184 = scalar_select %p183, %s17, 1
      %p185 = scmp.lt.s32.totalorder %s18, 0
      %s186 = scalar_select %p185, %s18, 0
      %s187 = sadd.s32 %s186, %s184
      %s188 = smul.addr %s187, 8
      %s189 = scalar_lea.vmem %s2, %s188
      %v190 = vld [vmem:[%s177] sm:$0xff]
      %v191 = vld [vmem:[%s182] sm:$0xff]
      %v192 = vld [vmem:[%s182 + $0x8] sm:$0xff]
      %v193 = vld [vmem:[%s182 + $0x10] sm:$0xff]
      %v194 = vld [vmem:[%s182 + $0x18] sm:$0xff]
      %196 = vset.pattern.permute.xlu0 32
      %197 = vperm.xlu0 %196, %v191
      %v198 = vpop.permute.xlu0 %197
      %201 = vset.pattern.permute.xlu0 32
      %202 = vperm.xlu0 %201, %v192
      %v203 = vpop.permute.xlu0 %202
      %206 = vset.pattern.permute.xlu0 32
      %207 = vperm.xlu0 %206, %v193
      %v208 = vpop.permute.xlu0 %207
      %211 = vset.pattern.permute.xlu0 32
      %212 = vperm.xlu0 %211, %v194
      %v213 = vpop.permute.xlu0 %212
      %vm215 = vcmask 64512
      %v216 = vsel %vm215, %v191, 0
      %v218 = vsel %vm215, %v192, 0
      %v220 = vsel %vm215, %v193, 0
      %v222 = vsel %vm215, %v194, 0
      %224 = vmatprep.subr.mxu0 0.0
      %225 = vmatpush1.msra.mxu0 %v190
      %226 = vmatprep.subr.mxu0 0.0
      %227 = vmatpush1.msra.mxu0 0.0
      %228 = vmatprep.subr.mxu0 0.0
      %229 = vmatpush1.msra.mxu0 0.0
      %230 = vmatprep.subr.mxu0 0.0
      %231 = vmatpush1.msra.mxu0 0.0
      %232 = vmatprep.subr.mxu0 0.0
      %233 = vmatpush1.msra.mxu0 0.0
      %234 = vmatprep.subr.mxu0 0.0
      %235 = vmatpush1.msra.mxu0 0.0
      %236 = vmatprep.subr.mxu0 0.0
      %237 = vmatpush1.msra.mxu0 0.0
      %238 = vmatprep.subr.mxu0 0.0
      %239 = vmatpush1.msra.mxu0 0.0
      %240 = vmatprep.subr.mxu0 0.0
      %241 = vmatpush1.msra.mxu0 0.0
      %242 = vmatprep.subr.mxu0 0.0
      %243 = vmatpush1.msra.mxu0 0.0
      %244 = vmatprep.subr.mxu0 0.0
      %245 = vmatpush1.msra.mxu0 0.0
      %246 = vmatprep.subr.mxu0 0.0
      %247 = vmatpush1.msra.mxu0 0.0
      %248 = vmatprep.subr.mxu0 0.0
      %249 = vmatpush1.msra.mxu0 0.0
      %250 = vmatprep.subr.mxu0 0.0
      %251 = vmatpush1.msra.mxu0 0.0
      %252 = vmatprep.subr.mxu0 0.0
      %253 = vmatpush1.msra.mxu0 0.0
      %254 = vmatprep.subr.mxu0 0.0
      %255 = vmatpush1.msra.mxu0 0.0
      %256 = vmatprep.subr.mxu0 0.0
      %257 = vmatpush1.msra.mxu0 0.0
      %258 = vmatprep.subr.mxu0 0.0
      %259 = vmatpush1.msra.mxu0 0.0
      %260 = vmatprep.subr.mxu0 0.0
      %261 = vmatpush1.msra.mxu0 0.0
      %262 = vmatprep.subr.mxu0 0.0
      %263 = vmatpush1.msra.mxu0 0.0
      %264 = vmatprep.subr.mxu0 0.0
      %265 = vmatpush1.msra.mxu0 0.0
      %266 = vmatprep.subr.mxu0 0.0
      %267 = vmatpush1.msra.mxu0 0.0
      %268 = vmatprep.subr.mxu0 0.0
      %269 = vmatpush1.msra.mxu0 0.0
      %270 = vmatprep.subr.mxu0 0.0
      %271 = vmatpush1.msra.mxu0 0.0
      %272 = vmatprep.subr.mxu0 0.0
      %273 = vmatpush1.msra.mxu0 0.0
      %274 = vmatprep.subr.mxu0 0.0
      %275 = vmatpush1.msra.mxu0 0.0
      %276 = vmatprep.subr.mxu0 0.0
      %277 = vmatpush1.msra.mxu0 0.0
      %278 = vmatprep.subr.mxu0 0.0
      %279 = vmatpush1.msra.mxu0 0.0
      %280 = vmatprep.subr.mxu0 0.0
      %281 = vmatpush1.msra.mxu0 0.0
      %282 = vmatprep.subr.mxu0 0.0
      %283 = vmatpush1.msra.mxu0 0.0
      %284 = vmatprep.subr.mxu0 0.0
      %285 = vmatpush1.msra.mxu0 0.0
      %286 = vmatprep.subr.mxu0 0.0
      %287 = vmatpush1.msra.mxu0 0.0
      %288 = vmatprep.mubr.f32.mxu0 0.0
      %289 = vmatmul.mubr.f32.gmra.mrb[0].mxu0 %v216
      %v290 = vpop.f32.mrb[0].mxu0
      %v291 = vadd.f32 %v198, %v290
      %v292 = vpop.f32.mrb[0].mxu0
      %293 = vmatprep.mubr.f32.mxu0 0.0
      %294 = vmatmul.mubr.f32.gmra.mrb[0].mxu0 %v218
      %v295 = vpop.f32.mrb[0].mxu0
      %v296 = vadd.f32 %v203, %v295
      %v297 = vpop.f32.mrb[0].mxu0
      %298 = vmatprep.mubr.f32.mxu0 0.0
      %299 = vmatmul.mubr.f32.gmra.mrb[0].mxu0 %v220
      %v300 = vpop.f32.mrb[0].mxu0
      %v301 = vadd.f32 %v208, %v300
      %v302 = vpop.f32.mrb[0].mxu0
      %303 = vmatprep.mubr.f32.mxu0 0.0
      %304 = vmatmul.mubr.f32.gmra.mrb[0].mxu0 %v222
      %v305 = vpop.f32.mrb[0].mxu0
      %v306 = vadd.f32 %v213, %v305
      %v307 = vpop.f32.mrb[0].mxu0
      %308 = vdwg.mxu0
      %v309 = vand.u32 2147483647, %v190
      %vm310 = vcmp.le.f32.partialorder %v309, 0.7853982
      %vm311 = vcmp.lt.s32.totalorder %v190, 0
      %v312 = vand.u32 %v190, 2139095040
      %v313 = vshrl.u32 %v312, 23
      %v314 = vsub.s32 %v313, 127
      %v315 = vand.u32 2147483647, %v190
      %v316 = vand.u32 %v315, 8388607
      %v317 = vor.u32 %v316, 8388608
      %v318 = vsub.s32 0, %v317
      %v319 = vadd.s32 %v314, 1
      %vm320 = vcmp.gt.s32.totalorder %v319, 0
      %v321 = vsel %vm320, %v319, 0
      %v322 = vshrl.u32 %v321, 5
      %v323 = vand.u32 %v321, 31
      %v324 = vsub.s32 32, %v323
      %v325 = vshrl.u32 683565275, %v324
      %v326 = vshll.u32 683565275, %v323
      %v327 = vshrl.u32 2475754826, %v324
      %v328 = vor.u32 %v326, %v327
      %v329 = vshll.u32 2475754826, %v323
      %v330 = vshrl.u32 2131351028, %v324
      %v331 = vor.u32 %v329, %v330
      %v332 = vshll.u32 2131351028, %v323
      %v333 = vshrl.u32 2102212464, %v324
      %v334 = vor.u32 %v332, %v333
      %v335 = vshll.u32 2102212464, %v323
      %v336 = vshrl.u32 920167782, %v324
      %v337 = vor.u32 %v335, %v336
      %v338 = vshll.u32 920167782, %v323
      %v339 = vshrl.u32 1326507024, %v324
      %v340 = vor.u32 %v338, %v339
      %vm341 = vcmp.lt.s32.totalorder %v322, 1
      %vm342 = vcmp.lt.s32.totalorder %v322, 2
      %vm343 = vcmp.lt.s32.totalorder %v322, 3
      %vm344 = vcmp.lt.s32.totalorder %v322, 4
      %v345 = vsel %vm341, %v325, %v328
      %v346 = vsel %vm344, %v334, 2102212464
      %v347 = vsel %vm343, %v331, %v346
      %v348 = vsel %vm342, %v345, %v347
      %v349 = vsel %vm341, %v328, %v331
      %v350 = vsel %vm344, %v337, 920167782
      %v351 = vsel %vm343, %v334, %v350
      %v352 = vsel %vm342, %v349, %v351
      %v353 = vsel %vm341, %v331, %v334
      %v354 = vsel %vm344, %v340, 1326507024
      %v355 = vsel %vm343, %v337, %v354
      %v356 = vsel %vm342, %v353, %v355
      %v357 = vshll.u32 %v317, 8
      %v358 = vmul.u32.u64.compose %v357, %v356
      %v359 = vextract.low.u32 %v358
      %v360 = vextract.high.u32 %v358
      %v361 = vmul.u32.u64.compose %v357, %v352
      %v362 = vextract.low.u32 %v361
      %v363 = vextract.high.u32 %v361
      %v364 = vmul.u32 %v357, %v348
      %v365 = vadd.s32 %v360, %v362
      %vm366 = vc.u32 %v360, %v362
      %v367 = vadd.s32 %v363, 1
      %v368 = vsel %vm366, %v367, %v363
      %v369 = vadd.s32 %v364, %v368
      %v370 = vadd.s32 %v369, 536870912
      %v371 = vshrl.u32 %v370, 30
      %v372 = vshll.u32 %v371, 30
      %v373 = vsub.s32 %v369, %v372
      %vm374 = vcmp.lt.s32.totalorder %v373, 0
      %v375 = vsub.s32 0, %v373
      %v376 = vsel %vm374, %v375, %v373
      %v377 = vclz %v376
      %v378 = vsub.s32 %v377, 2
      %vm379 = vcmp.gt.s32.totalorder 0, %v378
      %v380 = vsel %vm379, 0, %v378
      %v381 = vsub.s32 32, %v380
      %v382 = vshll.u32 %v373, %v380
      %v383 = vshrl.u32 %v365, %v381
      %v384 = vor.u32 %v382, %v383
      %v385 = vsub.s32 4294967266, %v380
      %v386 = vadd.s32 %v385, 127
      %v387 = vshll.u32 %v386, 23
      %v388 = vor.u32 4788187, %v387
      %v389 = vand.u32 2147483647, %v388
      %v391 = vcvt.s32.f32 %v384
      %v392 = vmul.f32 %v391, %v389
      %v393 = vxor.u32 %v392, 2147483648
      %v394 = vsel %vm311, %v393, %v392
      %v395 = vsub.s32 4, %v371
      %v396 = vsel %vm311, %v395, %v371
      %v397 = vsel %vm310, %v190, %v394
      %v398 = vsel %vm310, 0, %v396
      %v399 = vcosq.f32.pop %v397
      %v400 = vsinq.f32.pop %v397
      %vm401 = vweird.f32 %v190
      %v402 = vadd.s32 %v398, 3
      %v403 = vand.u32 %v402, 3
      %vm404 = vcmp.lt.s32.totalorder %v403, 2
      %vm405 = vcmp.eq.s32.totalorder %v403, 0
      %v406 = vxor.u32 %v400, 2147483648
      %v407 = vsel %vm405, %v399, %v406
      %vm408 = vcmp.eq.s32.totalorder %v403, 2
      %v409 = vxor.u32 %v399, 2147483648
      %v410 = vsel %vm408, %v409, %v400
      %v411 = vsel %vm404, %v407, %v410
      %v412 = vsel %vm401, nan, %v411
      %v413 = vand.u32 2147483647, %v190
      %vm414 = vcmp.le.f32.partialorder %v413, 0.7853982
      %vm415 = vcmp.lt.s32.totalorder %v190, 0
      %v416 = vand.u32 %v190, 2139095040
      %v417 = vshrl.u32 %v416, 23
      %v418 = vsub.s32 %v417, 127
      %v419 = vand.u32 2147483647, %v190
      %v420 = vand.u32 %v419, 8388607
      %v421 = vor.u32 %v420, 8388608
      %v422 = vsub.s32 0, %v421
      %v423 = vadd.s32 %v418, 1
      %vm424 = vcmp.gt.s32.totalorder %v423, 0
      %v425 = vsel %vm424, %v423, 0
      %v426 = vshrl.u32 %v425, 5
      %v427 = vand.u32 %v425, 31
      %v428 = vsub.s32 32, %v427
      %v429 = vshrl.u32 683565275, %v428
      %v430 = vshll.u32 683565275, %v427
      %v431 = vshrl.u32 2475754826, %v428
      %v432 = vor.u32 %v430, %v431
      %v433 = vshll.u32 2475754826, %v427
      %v434 = vshrl.u32 2131351028, %v428
      %v435 = vor.u32 %v433, %v434
      %v436 = vshll.u32 2131351028, %v427
      %v437 = vshrl.u32 2102212464, %v428
      %v438 = vor.u32 %v436, %v437
      %v439 = vshll.u32 2102212464, %v427
      %v440 = vshrl.u32 920167782, %v428
      %v441 = vor.u32 %v439, %v440
      %v442 = vshll.u32 920167782, %v427
      %v443 = vshrl.u32 1326507024, %v428
      %v444 = vor.u32 %v442, %v443
      %vm445 = vcmp.lt.s32.totalorder %v426, 1
      %vm446 = vcmp.lt.s32.totalorder %v426, 2
      %vm447 = vcmp.lt.s32.totalorder %v426, 3
      %vm448 = vcmp.lt.s32.totalorder %v426, 4
      %v449 = vsel %vm445, %v429, %v432
      %v450 = vsel %vm448, %v438, 2102212464
      %v451 = vsel %vm447, %v435, %v450
      %v452 = vsel %vm446, %v449, %v451
      %v453 = vsel %vm445, %v432, %v435
      %v454 = vsel %vm448, %v441, 920167782
      %v455 = vsel %vm447, %v438, %v454
      %v456 = vsel %vm446, %v453, %v455
      %v457 = vsel %vm445, %v435, %v438
      %v458 = vsel %vm448, %v444, 1326507024
      %v459 = vsel %vm447, %v441, %v458
      %v460 = vsel %vm446, %v457, %v459
      %v461 = vshll.u32 %v421, 8
      %v462 = vmul.u32.u64.compose %v461, %v460
      %v463 = vextract.low.u32 %v462
      %v464 = vextract.high.u32 %v462
      %v465 = vmul.u32.u64.compose %v461, %v456
      %v466 = vextract.low.u32 %v465
      %v467 = vextract.high.u32 %v465
      %v468 = vmul.u32 %v461, %v452
      %v469 = vadd.s32 %v464, %v466
      %vm470 = vc.u32 %v464, %v466
      %v471 = vadd.s32 %v467, 1
      %v472 = vsel %vm470, %v471, %v467
      %v473 = vadd.s32 %v468, %v472
      %v474 = vadd.s32 %v473, 536870912
      %v475 = vshrl.u32 %v474, 30
      %v476 = vshll.u32 %v475, 30
      %v477 = vsub.s32 %v473, %v476
      %vm478 = vcmp.lt.s32.totalorder %v477, 0
      %v479 = vsub.s32 0, %v477
      %v480 = vsel %vm478, %v479, %v477
      %v481 = vclz %v480
      %v482 = vsub.s32 %v481, 2
      %vm483 = vcmp.gt.s32.totalorder 0, %v482
      %v484 = vsel %vm483, 0, %v482
      %v485 = vsub.s32 32, %v484
      %v486 = vshll.u32 %v477, %v484
      %v487 = vshrl.u32 %v469, %v485
      %v488 = vor.u32 %v486, %v487
      %v489 = vsub.s32 4294967266, %v484
      %v490 = vadd.s32 %v489, 127
      %v491 = vshll.u32 %v490, 23
      %v492 = vor.u32 4788187, %v491
      %v493 = vand.u32 2147483647, %v492
      %v495 = vcvt.s32.f32 %v488
      %v496 = vmul.f32 %v495, %v493
      %v497 = vxor.u32 %v496, 2147483648
      %v498 = vsel %vm415, %v497, %v496
      %v499 = vsub.s32 4, %v475
      %v500 = vsel %vm415, %v499, %v475
      %v501 = vsel %vm414, %v190, %v498
      %v502 = vsel %vm414, 0, %v500
      %v503 = vcosq.f32.pop %v501
      %v504 = vsinq.f32.pop %v501
      %vm505 = vweird.f32 %v190
      %v506 = vand.u32 %v502, 3
      %vm507 = vcmp.lt.s32.totalorder %v506, 2
      %vm508 = vcmp.eq.s32.totalorder %v506, 0
      %v509 = vxor.u32 %v504, 2147483648
      %v510 = vsel %vm508, %v503, %v509
      %vm511 = vcmp.eq.s32.totalorder %v506, 2
      %v512 = vxor.u32 %v503, 2147483648
      %v513 = vsel %vm511, %v512, %v504
      %v514 = vsel %vm507, %v510, %v513
      %v515 = vsel %vm505, nan, %v514
      %v516 = vld [vmem:[%s182 + $0x20] sm:$0xff]
      %v517 = vld [vmem:[%s182 + $0x28] sm:$0xff]
      %v518 = vld [vmem:[%s182 + $0x30] sm:$0xff]
      %v519 = vld [vmem:[%s182 + $0x38] sm:$0xff]
      %v520 = vld [vmem:[%s182 + $0x40] sm:$0xff]
      %v521 = vld [vmem:[%s182 + $0x48] sm:$0xff]
      %v522 = vld [vmem:[%s182 + $0x50] sm:$0xff]
      %v523 = vld [vmem:[%s182 + $0x58] sm:$0xff]
      %v525 = vsel %vm215, %v516, 0
      %v528 = vsel %vm215, %v517, 0
      %v531 = vsel %vm215, %v518, 0
      %v534 = vsel %vm215, %v519, 0
      %536 = vmatprep.subr.mxu0 0.0
      %537 = vmatpush1.msra.mxu0 %v412
      %538 = vmatprep.subr.mxu0 0.0
      %539 = vmatpush1.msra.mxu0 0.0
      %540 = vmatprep.subr.mxu0 0.0
      %541 = vmatpush1.msra.mxu0 0.0
      %542 = vmatprep.subr.mxu0 0.0
      %543 = vmatpush1.msra.mxu0 0.0
      %544 = vmatprep.subr.mxu0 0.0
      %545 = vmatpush1.msra.mxu0 0.0
      %546 = vmatprep.subr.mxu0 0.0
      %547 = vmatpush1.msra.mxu0 0.0
      %548 = vmatprep.subr.mxu0 0.0
      %549 = vmatpush1.msra.mxu0 0.0
      %550 = vmatprep.subr.mxu0 0.0
      %551 = vmatpush1.msra.mxu0 0.0
      %552 = vmatprep.subr.mxu0 0.0
      %553 = vmatpush1.msra.mxu0 0.0
      %554 = vmatprep.subr.mxu0 0.0
      %555 = vmatpush1.msra.mxu0 0.0
      %556 = vmatprep.subr.mxu0 0.0
      %557 = vmatpush1.msra.mxu0 0.0
      %558 = vmatprep.subr.mxu0 0.0
      %559 = vmatpush1.msra.mxu0 0.0
      %560 = vmatprep.subr.mxu0 0.0
      %561 = vmatpush1.msra.mxu0 0.0
      %562 = vmatprep.subr.mxu0 0.0
      %563 = vmatpush1.msra.mxu0 0.0
      %564 = vmatprep.subr.mxu0 0.0
      %565 = vmatpush1.msra.mxu0 0.0
      %566 = vmatprep.subr.mxu0 0.0
      %567 = vmatpush1.msra.mxu0 0.0
      %568 = vmatprep.subr.mxu0 0.0
      %569 = vmatpush1.msra.mxu0 0.0
      %570 = vmatprep.subr.mxu0 0.0
      %571 = vmatpush1.msra.mxu0 0.0
      %572 = vmatprep.subr.mxu0 0.0
      %573 = vmatpush1.msra.mxu0 0.0
      %574 = vmatprep.subr.mxu0 0.0
      %575 = vmatpush1.msra.mxu0 0.0
      %576 = vmatprep.subr.mxu0 0.0
      %577 = vmatpush1.msra.mxu0 0.0
      %578 = vmatprep.subr.mxu0 0.0
      %579 = vmatpush1.msra.mxu0 0.0
      %580 = vmatprep.subr.mxu0 0.0
      %581 = vmatpush1.msra.mxu0 0.0
      %582 = vmatprep.subr.mxu0 0.0
      %583 = vmatpush1.msra.mxu0 0.0
      %584 = vmatprep.subr.mxu0 0.0
      %585 = vmatpush1.msra.mxu0 0.0
      %586 = vmatprep.subr.mxu0 0.0
      %587 = vmatpush1.msra.mxu0 0.0
      %588 = vmatprep.subr.mxu0 0.0
      %589 = vmatpush1.msra.mxu0 0.0
      %590 = vmatprep.subr.mxu0 0.0
      %591 = vmatpush1.msra.mxu0 0.0
      %592 = vmatprep.subr.mxu0 0.0
      %593 = vmatpush1.msra.mxu0 0.0
      %594 = vmatprep.subr.mxu0 0.0
      %595 = vmatpush1.msra.mxu0 0.0
      %596 = vmatprep.subr.mxu0 0.0
      %597 = vmatpush1.msra.mxu0 0.0
      %598 = vmatprep.subr.mxu0 0.0
      %599 = vmatpush1.msra.mxu0 0.0
      %600 = vmatprep.mubr.f32.mxu0 0.0
      %601 = vmatmul.mubr.f32.gmra.mrb[0].mxu0 %v525
      %v602 = vpop.f32.mrb[0].mxu0
      %v603 = vadd.f32 0.0, %v602
      %v604 = vpop.f32.mrb[0].mxu0
      %605 = vmatprep.mubr.f32.mxu0 0.0
      %606 = vmatmul.mubr.f32.gmra.mrb[0].mxu0 %v528
      %v607 = vpop.f32.mrb[0].mxu0
      %v608 = vadd.f32 0.0, %v607
      %v609 = vpop.f32.mrb[0].mxu0
      %610 = vmatprep.mubr.f32.mxu0 0.0
      %611 = vmatmul.mubr.f32.gmra.mrb[0].mxu0 %v531
      %v612 = vpop.f32.mrb[0].mxu0
      %v613 = vadd.f32 0.0, %v612
      %v614 = vpop.f32.mrb[0].mxu0
      %615 = vmatprep.mubr.f32.mxu0 0.0
      %616 = vmatmul.mubr.f32.gmra.mrb[0].mxu0 %v534
      %v617 = vpop.f32.mrb[0].mxu0
      %v618 = vadd.f32 0.0, %v617
      %v619 = vpop.f32.mrb[0].mxu0
      %620 = vdwg.mxu0
      %v621 = vadd.f32 %v291, %v603
      %v622 = vadd.f32 %v296, %v608
      %v623 = vadd.f32 %v301, %v613
      %v624 = vadd.f32 %v306, %v618
      %v626 = vsel %vm215, %v520, 0
      %v629 = vsel %vm215, %v521, 0
      %v632 = vsel %vm215, %v522, 0
      %v635 = vsel %vm215, %v523, 0
      %637 = vmatprep.subr.mxu0 0.0
      %638 = vmatpush1.msra.mxu0 %v515
      %639 = vmatprep.subr.mxu0 0.0
      %640 = vmatpush1.msra.mxu0 0.0
      %641 = vmatprep.subr.mxu0 0.0
      %642 = vmatpush1.msra.mxu0 0.0
      %643 = vmatprep.subr.mxu0 0.0
      %644 = vmatpush1.msra.mxu0 0.0
      %645 = vmatprep.subr.mxu0 0.0
      %646 = vmatpush1.msra.mxu0 0.0
      %647 = vmatprep.subr.mxu0 0.0
      %648 = vmatpush1.msra.mxu0 0.0
      %649 = vmatprep.subr.mxu0 0.0
      %650 = vmatpush1.msra.mxu0 0.0
      %651 = vmatprep.subr.mxu0 0.0
      %652 = vmatpush1.msra.mxu0 0.0
      %653 = vmatprep.subr.mxu0 0.0
      %654 = vmatpush1.msra.mxu0 0.0
      %655 = vmatprep.subr.mxu0 0.0
      %656 = vmatpush1.msra.mxu0 0.0
      %657 = vmatprep.subr.mxu0 0.0
      %658 = vmatpush1.msra.mxu0 0.0
      %659 = vmatprep.subr.mxu0 0.0
      %660 = vmatpush1.msra.mxu0 0.0
      %661 = vmatprep.subr.mxu0 0.0
      %662 = vmatpush1.msra.mxu0 0.0
      %663 = vmatprep.subr.mxu0 0.0
      %664 = vmatpush1.msra.mxu0 0.0
      %665 = vmatprep.subr.mxu0 0.0
      %666 = vmatpush1.msra.mxu0 0.0
      %667 = vmatprep.subr.mxu0 0.0
      %668 = vmatpush1.msra.mxu0 0.0
      %669 = vmatprep.subr.mxu0 0.0
      %670 = vmatpush1.msra.mxu0 0.0
      %671 = vmatprep.subr.mxu0 0.0
      %672 = vmatpush1.msra.mxu0 0.0
      %673 = vmatprep.subr.mxu0 0.0
      %674 = vmatpush1.msra.mxu0 0.0
      %675 = vmatprep.subr.mxu0 0.0
      %676 = vmatpush1.msra.mxu0 0.0
      %677 = vmatprep.subr.mxu0 0.0
      %678 = vmatpush1.msra.mxu0 0.0
      %679 = vmatprep.subr.mxu0 0.0
      %680 = vmatpush1.msra.mxu0 0.0
      %681 = vmatprep.subr.mxu0 0.0
      %682 = vmatpush1.msra.mxu0 0.0
      %683 = vmatprep.subr.mxu0 0.0
      %684 = vmatpush1.msra.mxu0 0.0
      %685 = vmatprep.subr.mxu0 0.0
      %686 = vmatpush1.msra.mxu0 0.0
      %687 = vmatprep.subr.mxu0 0.0
      %688 = vmatpush1.msra.mxu0 0.0
      %689 = vmatprep.subr.mxu0 0.0
      %690 = vmatpush1.msra.mxu0 0.0
      %691 = vmatprep.subr.mxu0 0.0
      %692 = vmatpush1.msra.mxu0 0.0
      %693 = vmatprep.subr.mxu0 0.0
      %694 = vmatpush1.msra.mxu0 0.0
      %695 = vmatprep.subr.mxu0 0.0
      %696 = vmatpush1.msra.mxu0 0.0
      %697 = vmatprep.subr.mxu0 0.0
      %698 = vmatpush1.msra.mxu0 0.0
      %699 = vmatprep.subr.mxu0 0.0
      %700 = vmatpush1.msra.mxu0 0.0
      %701 = vmatprep.mubr.f32.mxu0 0.0
      %702 = vmatmul.mubr.f32.gmra.mrb[0].mxu0 %v626
      %v703 = vpop.f32.mrb[0].mxu0
      %v704 = vadd.f32 0.0, %v703
      %v705 = vpop.f32.mrb[0].mxu0
      %706 = vmatprep.mubr.f32.mxu0 0.0
      %707 = vmatmul.mubr.f32.gmra.mrb[0].mxu0 %v629
      %v708 = vpop.f32.mrb[0].mxu0
      %v709 = vadd.f32 0.0, %v708
      %v710 = vpop.f32.mrb[0].mxu0
      %711 = vmatprep.mubr.f32.mxu0 0.0
      %712 = vmatmul.mubr.f32.gmra.mrb[0].mxu0 %v632
      %v713 = vpop.f32.mrb[0].mxu0
      %v714 = vadd.f32 0.0, %v713
      %v715 = vpop.f32.mrb[0].mxu0
      %716 = vmatprep.mubr.f32.mxu0 0.0
      %717 = vmatmul.mubr.f32.gmra.mrb[0].mxu0 %v635
      %v718 = vpop.f32.mrb[0].mxu0
      %v719 = vadd.f32 0.0, %v718
      %v720 = vpop.f32.mrb[0].mxu0
      %721 = vdwg.mxu0
      %v722 = vadd.f32 %v621, %v704
      %v723 = vadd.f32 %v622, %v709
      %v724 = vadd.f32 %v623, %v714
      %v725 = vadd.f32 %v624, %v719
      %v726 = vmul.f32 %v412, 2.0
      %v727 = vmul.f32 %v726, %v515
      %v728 = vmul.f32 %v515, 2.0
      %v729 = vmul.f32 %v728, %v515
      %v730 = vsub.f32 %v729, 1.0
      %v731 = vld [vmem:[%s182 + $0x60] sm:$0xff]
      %v732 = vld [vmem:[%s182 + $0x68] sm:$0xff]
      %v733 = vld [vmem:[%s182 + $0x70] sm:$0xff]
      %v734 = vld [vmem:[%s182 + $0x78] sm:$0xff]
      %v735 = vld [vmem:[%s182 + $0x80] sm:$0xff]
      %v736 = vld [vmem:[%s182 + $0x88] sm:$0xff]
      %v737 = vld [vmem:[%s182 + $0x90] sm:$0xff]
      %v738 = vld [vmem:[%s182 + $0x98] sm:$0xff]
      %v740 = vsel %vm215, %v731, 0
      %v743 = vsel %vm215, %v732, 0
      %v746 = vsel %vm215, %v733, 0
      %v749 = vsel %vm215, %v734, 0
      %751 = vmatprep.subr.mxu0 0.0
      %752 = vmatpush1.msra.mxu0 %v727
      %753 = vmatprep.subr.mxu0 0.0
      %754 = vmatpush1.msra.mxu0 0.0
      %755 = vmatprep.subr.mxu0 0.0
      %756 = vmatpush1.msra.mxu0 0.0
      %757 = vmatprep.subr.mxu0 0.0
      %758 = vmatpush1.msra.mxu0 0.0
      %759 = vmatprep.subr.mxu0 0.0
      %760 = vmatpush1.msra.mxu0 0.0
      %761 = vmatprep.subr.mxu0 0.0
      %762 = vmatpush1.msra.mxu0 0.0
      %763 = vmatprep.subr.mxu0 0.0
      %764 = vmatpush1.msra.mxu0 0.0
      %765 = vmatprep.subr.mxu0 0.0
      %766 = vmatpush1.msra.mxu0 0.0
      %767 = vmatprep.subr.mxu0 0.0
      %768 = vmatpush1.msra.mxu0 0.0
      %769 = vmatprep.subr.mxu0 0.0
      %770 = vmatpush1.msra.mxu0 0.0
      %771 = vmatprep.subr.mxu0 0.0
      %772 = vmatpush1.msra.mxu0 0.0
      %773 = vmatprep.subr.mxu0 0.0
      %774 = vmatpush1.msra.mxu0 0.0
      %775 = vmatprep.subr.mxu0 0.0
      %776 = vmatpush1.msra.mxu0 0.0
      %777 = vmatprep.subr.mxu0 0.0
      %778 = vmatpush1.msra.mxu0 0.0
      %779 = vmatprep.subr.mxu0 0.0
      %780 = vmatpush1.msra.mxu0 0.0
      %781 = vmatprep.subr.mxu0 0.0
      %782 = vmatpush1.msra.mxu0 0.0
      %783 = vmatprep.subr.mxu0 0.0
      %784 = vmatpush1.msra.mxu0 0.0
      %785 = vmatprep.subr.mxu0 0.0
      %786 = vmatpush1.msra.mxu0 0.0
      %787 = vmatprep.subr.mxu0 0.0
      %788 = vmatpush1.msra.mxu0 0.0
      %789 = vmatprep.subr.mxu0 0.0
      %790 = vmatpush1.msra.mxu0 0.0
      %791 = vmatprep.subr.mxu0 0.0
      %792 = vmatpush1.msra.mxu0 0.0
      %793 = vmatprep.subr.mxu0 0.0
      %794 = vmatpush1.msra.mxu0 0.0
      %795 = vmatprep.subr.mxu0 0.0
      %796 = vmatpush1.msra.mxu0 0.0
      %797 = vmatprep.subr.mxu0 0.0
      %798 = vmatpush1.msra.mxu0 0.0
      %799 = vmatprep.subr.mxu0 0.0
      %800 = vmatpush1.msra.mxu0 0.0
      %801 = vmatprep.subr.mxu0 0.0
      %802 = vmatpush1.msra.mxu0 0.0
      %803 = vmatprep.subr.mxu0 0.0
      %804 = vmatpush1.msra.mxu0 0.0
      %805 = vmatprep.subr.mxu0 0.0
      %806 = vmatpush1.msra.mxu0 0.0
      %807 = vmatprep.subr.mxu0 0.0
      %808 = vmatpush1.msra.mxu0 0.0
      %809 = vmatprep.subr.mxu0 0.0
      %810 = vmatpush1.msra.mxu0 0.0
      %811 = vmatprep.subr.mxu0 0.0
      %812 = vmatpush1.msra.mxu0 0.0
      %813 = vmatprep.subr.mxu0 0.0
      %814 = vmatpush1.msra.mxu0 0.0
      %815 = vmatprep.mubr.f32.mxu0 0.0
      %816 = vmatmul.mubr.f32.gmra.mrb[0].mxu0 %v740
      %v817 = vpop.f32.mrb[0].mxu0
      %v818 = vadd.f32 0.0, %v817
      %v819 = vpop.f32.mrb[0].mxu0
      %820 = vmatprep.mubr.f32.mxu0 0.0
      %821 = vmatmul.mubr.f32.gmra.mrb[0].mxu0 %v743
      %v822 = vpop.f32.mrb[0].mxu0
      %v823 = vadd.f32 0.0, %v822
      %v824 = vpop.f32.mrb[0].mxu0
      %825 = vmatprep.mubr.f32.mxu0 0.0
      %826 = vmatmul.mubr.f32.gmra.mrb[0].mxu0 %v746
      %v827 = vpop.f32.mrb[0].mxu0
      %v828 = vadd.f32 0.0, %v827
      %v829 = vpop.f32.mrb[0].mxu0
      %830 = vmatprep.mubr.f32.mxu0 0.0
      %831 = vmatmul.mubr.f32.gmra.mrb[0].mxu0 %v749
      %v832 = vpop.f32.mrb[0].mxu0
      %v833 = vadd.f32 0.0, %v832
      %v834 = vpop.f32.mrb[0].mxu0
      %835 = vdwg.mxu0
      %v836 = vadd.f32 %v722, %v818
      %v837 = vadd.f32 %v723, %v823
      %v838 = vadd.f32 %v724, %v828
      %v839 = vadd.f32 %v725, %v833
      %v841 = vsel %vm215, %v735, 0
      %v844 = vsel %vm215, %v736, 0
      %v847 = vsel %vm215, %v737, 0
      %v850 = vsel %vm215, %v738, 0
      %852 = vmatprep.subr.mxu0 0.0
      %853 = vmatpush1.msra.mxu0 %v730
      %854 = vmatprep.subr.mxu0 0.0
      %855 = vmatpush1.msra.mxu0 0.0
      %856 = vmatprep.subr.mxu0 0.0
      %857 = vmatpush1.msra.mxu0 0.0
      %858 = vmatprep.subr.mxu0 0.0
      %859 = vmatpush1.msra.mxu0 0.0
      %860 = vmatprep.subr.mxu0 0.0
      %861 = vmatpush1.msra.mxu0 0.0
      %862 = vmatprep.subr.mxu0 0.0
      %863 = vmatpush1.msra.mxu0 0.0
      %864 = vmatprep.subr.mxu0 0.0
      %865 = vmatpush1.msra.mxu0 0.0
      %866 = vmatprep.subr.mxu0 0.0
      %867 = vmatpush1.msra.mxu0 0.0
      %868 = vmatprep.subr.mxu0 0.0
      %869 = vmatpush1.msra.mxu0 0.0
      %870 = vmatprep.subr.mxu0 0.0
      %871 = vmatpush1.msra.mxu0 0.0
      %872 = vmatprep.subr.mxu0 0.0
      %873 = vmatpush1.msra.mxu0 0.0
      %874 = vmatprep.subr.mxu0 0.0
      %875 = vmatpush1.msra.mxu0 0.0
      %876 = vmatprep.subr.mxu0 0.0
      %877 = vmatpush1.msra.mxu0 0.0
      %878 = vmatprep.subr.mxu0 0.0
      %879 = vmatpush1.msra.mxu0 0.0
      %880 = vmatprep.subr.mxu0 0.0
      %881 = vmatpush1.msra.mxu0 0.0
      %882 = vmatprep.subr.mxu0 0.0
      %883 = vmatpush1.msra.mxu0 0.0
      %884 = vmatprep.subr.mxu0 0.0
      %885 = vmatpush1.msra.mxu0 0.0
      %886 = vmatprep.subr.mxu0 0.0
      %887 = vmatpush1.msra.mxu0 0.0
      %888 = vmatprep.subr.mxu0 0.0
      %889 = vmatpush1.msra.mxu0 0.0
      %890 = vmatprep.subr.mxu0 0.0
      %891 = vmatpush1.msra.mxu0 0.0
      %892 = vmatprep.subr.mxu0 0.0
      %893 = vmatpush1.msra.mxu0 0.0
      %894 = vmatprep.subr.mxu0 0.0
      %895 = vmatpush1.msra.mxu0 0.0
      %896 = vmatprep.subr.mxu0 0.0
      %897 = vmatpush1.msra.mxu0 0.0
      %898 = vmatprep.subr.mxu0 0.0
      %899 = vmatpush1.msra.mxu0 0.0
      %900 = vmatprep.subr.mxu0 0.0
      %901 = vmatpush1.msra.mxu0 0.0
      %902 = vmatprep.subr.mxu0 0.0
      %903 = vmatpush1.msra.mxu0 0.0
      %904 = vmatprep.subr.mxu0 0.0
      %905 = vmatpush1.msra.mxu0 0.0
      %906 = vmatprep.subr.mxu0 0.0
      %907 = vmatpush1.msra.mxu0 0.0
      %908 = vmatprep.subr.mxu0 0.0
      %909 = vmatpush1.msra.mxu0 0.0
      %910 = vmatprep.subr.mxu0 0.0
      %911 = vmatpush1.msra.mxu0 0.0
      %912 = vmatprep.subr.mxu0 0.0
      %913 = vmatpush1.msra.mxu0 0.0
      %914 = vmatprep.subr.mxu0 0.0
      %915 = vmatpush1.msra.mxu0 0.0
      %916 = vmatprep.mubr.f32.mxu0 0.0
      %917 = vmatmul.mubr.f32.gmra.mrb[0].mxu0 %v841
      %v918 = vpop.f32.mrb[0].mxu0
      %v919 = vadd.f32 0.0, %v918
      %v920 = vpop.f32.mrb[0].mxu0
      %921 = vmatprep.mubr.f32.mxu0 0.0
      %922 = vmatmul.mubr.f32.gmra.mrb[0].mxu0 %v844
      %v923 = vpop.f32.mrb[0].mxu0
      %v924 = vadd.f32 0.0, %v923
      %v925 = vpop.f32.mrb[0].mxu0
      %926 = vmatprep.mubr.f32.mxu0 0.0
      %927 = vmatmul.mubr.f32.gmra.mrb[0].mxu0 %v847
      %v928 = vpop.f32.mrb[0].mxu0
      %v929 = vadd.f32 0.0, %v928
      %v930 = vpop.f32.mrb[0].mxu0
      %931 = vmatprep.mubr.f32.mxu0 0.0
      %932 = vmatmul.mubr.f32.gmra.mrb[0].mxu0 %v850
      %v933 = vpop.f32.mrb[0].mxu0
      %v934 = vadd.f32 0.0, %v933
      %v935 = vpop.f32.mrb[0].mxu0
      %936 = vdwg.mxu0
      %v937 = vadd.f32 %v836, %v919
      %v938 = vadd.f32 %v837, %v924
      %v939 = vadd.f32 %v838, %v929
      %v940 = vadd.f32 %v839, %v934
      %v941 = vmul.f32 %v727, 2.0
      %v942 = vmul.f32 %v941, %v730
      %v943 = vmul.f32 %v730, 2.0
      %v944 = vmul.f32 %v943, %v730
      %v945 = vsub.f32 %v944, 1.0
      %v946 = vld [vmem:[%s182 + $0xa0] sm:$0xff]
      %v947 = vld [vmem:[%s182 + $0xa8] sm:$0xff]
      %v948 = vld [vmem:[%s182 + $0xb0] sm:$0xff]
      %v949 = vld [vmem:[%s182 + $0xb8] sm:$0xff]
      %v950 = vld [vmem:[%s182 + $0xc0] sm:$0xff]
      %v951 = vld [vmem:[%s182 + $0xc8] sm:$0xff]
      %v952 = vld [vmem:[%s182 + $0xd0] sm:$0xff]
      %v953 = vld [vmem:[%s182 + $0xd8] sm:$0xff]
      %v955 = vsel %vm215, %v946, 0
      %v958 = vsel %vm215, %v947, 0
      %v961 = vsel %vm215, %v948, 0
      %v964 = vsel %vm215, %v949, 0
      %966 = vmatprep.subr.mxu0 0.0
      %967 = vmatpush1.msra.mxu0 %v942
      %968 = vmatprep.subr.mxu0 0.0
      %969 = vmatpush1.msra.mxu0 0.0
      %970 = vmatprep.subr.mxu0 0.0
      %971 = vmatpush1.msra.mxu0 0.0
      %972 = vmatprep.subr.mxu0 0.0
      %973 = vmatpush1.msra.mxu0 0.0
      %974 = vmatprep.subr.mxu0 0.0
      %975 = vmatpush1.msra.mxu0 0.0
      %976 = vmatprep.subr.mxu0 0.0
      %977 = vmatpush1.msra.mxu0 0.0
      %978 = vmatprep.subr.mxu0 0.0
      %979 = vmatpush1.msra.mxu0 0.0
      %980 = vmatprep.subr.mxu0 0.0
      %981 = vmatpush1.msra.mxu0 0.0
      %982 = vmatprep.subr.mxu0 0.0
      %983 = vmatpush1.msra.mxu0 0.0
      %984 = vmatprep.subr.mxu0 0.0
      %985 = vmatpush1.msra.mxu0 0.0
      %986 = vmatprep.subr.mxu0 0.0
      %987 = vmatpush1.msra.mxu0 0.0
      %988 = vmatprep.subr.mxu0 0.0
      %989 = vmatpush1.msra.mxu0 0.0
      %990 = vmatprep.subr.mxu0 0.0
      %991 = vmatpush1.msra.mxu0 0.0
      %992 = vmatprep.subr.mxu0 0.0
      %993 = vmatpush1.msra.mxu0 0.0
      %994 = vmatprep.subr.mxu0 0.0
      %995 = vmatpush1.msra.mxu0 0.0
      %996 = vmatprep.subr.mxu0 0.0
      %997 = vmatpush1.msra.mxu0 0.0
      %998 = vmatprep.subr.mxu0 0.0
      %999 = vmatpush1.msra.mxu0 0.0
      %1000 = vmatprep.subr.mxu0 0.0
      %1001 = vmatpush1.msra.mxu0 0.0
      %1002 = vmatprep.subr.mxu0 0.0
      %1003 = vmatpush1.msra.mxu0 0.0
      %1004 = vmatprep.subr.mxu0 0.0
      %1005 = vmatpush1.msra.mxu0 0.0
      %1006 = vmatprep.subr.mxu0 0.0
      %1007 = vmatpush1.msra.mxu0 0.0
      %1008 = vmatprep.subr.mxu0 0.0
      %1009 = vmatpush1.msra.mxu0 0.0
      %1010 = vmatprep.subr.mxu0 0.0
      %1011 = vmatpush1.msra.mxu0 0.0
      %1012 = vmatprep.subr.mxu0 0.0
      %1013 = vmatpush1.msra.mxu0 0.0
      %1014 = vmatprep.subr.mxu0 0.0
      %1015 = vmatpush1.msra.mxu0 0.0
      %1016 = vmatprep.subr.mxu0 0.0
      %1017 = vmatpush1.msra.mxu0 0.0
      %1018 = vmatprep.subr.mxu0 0.0
      %1019 = vmatpush1.msra.mxu0 0.0
      %1020 = vmatprep.subr.mxu0 0.0
      %1021 = vmatpush1.msra.mxu0 0.0
      %1022 = vmatprep.subr.mxu0 0.0
      %1023 = vmatpush1.msra.mxu0 0.0
      %1024 = vmatprep.subr.mxu0 0.0
      %1025 = vmatpush1.msra.mxu0 0.0
      %1026 = vmatprep.subr.mxu0 0.0
      %1027 = vmatpush1.msra.mxu0 0.0
      %1028 = vmatprep.subr.mxu0 0.0
      %1029 = vmatpush1.msra.mxu0 0.0
      %1030 = vmatprep.mubr.f32.mxu0 0.0
      %1031 = vmatmul.mubr.f32.gmra.mrb[0].mxu0 %v955
      %v1032 = vpop.f32.mrb[0].mxu0
      %v1033 = vadd.f32 0.0, %v1032
      %v1034 = vpop.f32.mrb[0].mxu0
      %1035 = vmatprep.mubr.f32.mxu0 0.0
      %1036 = vmatmul.mubr.f32.gmra.mrb[0].mxu0 %v958
      %v1037 = vpop.f32.mrb[0].mxu0
      %v1038 = vadd.f32 0.0, %v1037
      %v1039 = vpop.f32.mrb[0].mxu0
      %1040 = vmatprep.mubr.f32.mxu0 0.0
      %1041 = vmatmul.mubr.f32.gmra.mrb[0].mxu0 %v961
      %v1042 = vpop.f32.mrb[0].mxu0
      %v1043 = vadd.f32 0.0, %v1042
      %v1044 = vpop.f32.mrb[0].mxu0
      %1045 = vmatprep.mubr.f32.mxu0 0.0
      %1046 = vmatmul.mubr.f32.gmra.mrb[0].mxu0 %v964
      %v1047 = vpop.f32.mrb[0].mxu0
      %v1048 = vadd.f32 0.0, %v1047
      %v1049 = vpop.f32.mrb[0].mxu0
      %1050 = vdwg.mxu0
      %v1051 = vadd.f32 %v937, %v1033
      %v1052 = vadd.f32 %v938, %v1038
      %v1053 = vadd.f32 %v939, %v1043
      %v1054 = vadd.f32 %v940, %v1048
      %v1056 = vsel %vm215, %v950, 0
      %v1059 = vsel %vm215, %v951, 0
      %v1062 = vsel %vm215, %v952, 0
      %v1065 = vsel %vm215, %v953, 0
      %1067 = vmatprep.subr.mxu0 0.0
      %1068 = vmatpush1.msra.mxu0 %v945
      %1069 = vmatprep.subr.mxu0 0.0
      %1070 = vmatpush1.msra.mxu0 0.0
      %1071 = vmatprep.subr.mxu0 0.0
      %1072 = vmatpush1.msra.mxu0 0.0
      %1073 = vmatprep.subr.mxu0 0.0
      %1074 = vmatpush1.msra.mxu0 0.0
      %1075 = vmatprep.subr.mxu0 0.0
      %1076 = vmatpush1.msra.mxu0 0.0
      %1077 = vmatprep.subr.mxu0 0.0
      %1078 = vmatpush1.msra.mxu0 0.0
      %1079 = vmatprep.subr.mxu0 0.0
      %1080 = vmatpush1.msra.mxu0 0.0
      %1081 = vmatprep.subr.mxu0 0.0
      %1082 = vmatpush1.msra.mxu0 0.0
      %1083 = vmatprep.subr.mxu0 0.0
      %1084 = vmatpush1.msra.mxu0 0.0
      %1085 = vmatprep.subr.mxu0 0.0
      %1086 = vmatpush1.msra.mxu0 0.0
      %1087 = vmatprep.subr.mxu0 0.0
      %1088 = vmatpush1.msra.mxu0 0.0
      %1089 = vmatprep.subr.mxu0 0.0
      %1090 = vmatpush1.msra.mxu0 0.0
      %1091 = vmatprep.subr.mxu0 0.0
      %1092 = vmatpush1.msra.mxu0 0.0
      %1093 = vmatprep.subr.mxu0 0.0
      %1094 = vmatpush1.msra.mxu0 0.0
      %1095 = vmatprep.subr.mxu0 0.0
      %1096 = vmatpush1.msra.mxu0 0.0
      %1097 = vmatprep.subr.mxu0 0.0
      %1098 = vmatpush1.msra.mxu0 0.0
      %1099 = vmatprep.subr.mxu0 0.0
      %1100 = vmatpush1.msra.mxu0 0.0
      %1101 = vmatprep.subr.mxu0 0.0
      %1102 = vmatpush1.msra.mxu0 0.0
      %1103 = vmatprep.subr.mxu0 0.0
      %1104 = vmatpush1.msra.mxu0 0.0
      %1105 = vmatprep.subr.mxu0 0.0
      %1106 = vmatpush1.msra.mxu0 0.0
      %1107 = vmatprep.subr.mxu0 0.0
      %1108 = vmatpush1.msra.mxu0 0.0
      %1109 = vmatprep.subr.mxu0 0.0
      %1110 = vmatpush1.msra.mxu0 0.0
      %1111 = vmatprep.subr.mxu0 0.0
      %1112 = vmatpush1.msra.mxu0 0.0
      %1113 = vmatprep.subr.mxu0 0.0
      %1114 = vmatpush1.msra.mxu0 0.0
      %1115 = vmatprep.subr.mxu0 0.0
      %1116 = vmatpush1.msra.mxu0 0.0
      %1117 = vmatprep.subr.mxu0 0.0
      %1118 = vmatpush1.msra.mxu0 0.0
      %1119 = vmatprep.subr.mxu0 0.0
      %1120 = vmatpush1.msra.mxu0 0.0
      %1121 = vmatprep.subr.mxu0 0.0
      %1122 = vmatpush1.msra.mxu0 0.0
      %1123 = vmatprep.subr.mxu0 0.0
      %1124 = vmatpush1.msra.mxu0 0.0
      %1125 = vmatprep.subr.mxu0 0.0
      %1126 = vmatpush1.msra.mxu0 0.0
      %1127 = vmatprep.subr.mxu0 0.0
      %1128 = vmatpush1.msra.mxu0 0.0
      %1129 = vmatprep.subr.mxu0 0.0
      %1130 = vmatpush1.msra.mxu0 0.0
      %1131 = vmatprep.mubr.f32.mxu0 0.0
      %1132 = vmatmul.mubr.f32.gmra.mrb[0].mxu0 %v1056
      %v1133 = vpop.f32.mrb[0].mxu0
      %v1134 = vadd.f32 0.0, %v1133
      %v1135 = vpop.f32.mrb[0].mxu0
      %1136 = vmatprep.mubr.f32.mxu0 0.0
      %1137 = vmatmul.mubr.f32.gmra.mrb[0].mxu0 %v1059
      %v1138 = vpop.f32.mrb[0].mxu0
      %v1139 = vadd.f32 0.0, %v1138
      %v1140 = vpop.f32.mrb[0].mxu0
      %1141 = vmatprep.mubr.f32.mxu0 0.0
      %1142 = vmatmul.mubr.f32.gmra.mrb[0].mxu0 %v1062
      %v1143 = vpop.f32.mrb[0].mxu0
      %v1144 = vadd.f32 0.0, %v1143
      %v1145 = vpop.f32.mrb[0].mxu0
      %1146 = vmatprep.mubr.f32.mxu0 0.0
      %1147 = vmatmul.mubr.f32.gmra.mrb[0].mxu0 %v1065
      %v1148 = vpop.f32.mrb[0].mxu0
      %v1149 = vadd.f32 0.0, %v1148
      %v1150 = vpop.f32.mrb[0].mxu0
      %1151 = vdwg.mxu0
      %v1152 = vadd.f32 %v1051, %v1134
      %v1153 = vadd.f32 %v1052, %v1139
      %v1154 = vadd.f32 %v1053, %v1144
      %v1155 = vadd.f32 %v1054, %v1149
      %v1156 = vmul.f32 %v942, 2.0
      %v1157 = vmul.f32 %v1156, %v945
      %v1158 = vmul.f32 %v945, 2.0
      %v1159 = vmul.f32 %v1158, %v945
      %v1160 = vsub.f32 %v1159, 1.0
      %v1161 = vld [vmem:[%s182 + $0xe0] sm:$0xff]
      %v1162 = vld [vmem:[%s182 + $0xe8] sm:$0xff]
      %v1163 = vld [vmem:[%s182 + $0xf0] sm:$0xff]
      %v1164 = vld [vmem:[%s182 + $0xf8] sm:$0xff]
      %v1165 = vld [vmem:[%s182 + $0x100] sm:$0xff]
      %v1166 = vld [vmem:[%s182 + $0x108] sm:$0xff]
      %v1167 = vld [vmem:[%s182 + $0x110] sm:$0xff]
      %v1168 = vld [vmem:[%s182 + $0x118] sm:$0xff]
      %v1170 = vsel %vm215, %v1161, 0
      %v1173 = vsel %vm215, %v1162, 0
      %v1176 = vsel %vm215, %v1163, 0
      %v1179 = vsel %vm215, %v1164, 0
      %1181 = vmatprep.subr.mxu0 0.0
      %1182 = vmatpush1.msra.mxu0 %v1157
      %1183 = vmatprep.subr.mxu0 0.0
      %1184 = vmatpush1.msra.mxu0 0.0
      %1185 = vmatprep.subr.mxu0 0.0
      %1186 = vmatpush1.msra.mxu0 0.0
      %1187 = vmatprep.subr.mxu0 0.0
      %1188 = vmatpush1.msra.mxu0 0.0
      %1189 = vmatprep.subr.mxu0 0.0
      %1190 = vmatpush1.msra.mxu0 0.0
      %1191 = vmatprep.subr.mxu0 0.0
      %1192 = vmatpush1.msra.mxu0 0.0
      %1193 = vmatprep.subr.mxu0 0.0
      %1194 = vmatpush1.msra.mxu0 0.0
      %1195 = vmatprep.subr.mxu0 0.0
      %1196 = vmatpush1.msra.mxu0 0.0
      %1197 = vmatprep.subr.mxu0 0.0
      %1198 = vmatpush1.msra.mxu0 0.0
      %1199 = vmatprep.subr.mxu0 0.0
      %1200 = vmatpush1.msra.mxu0 0.0
      %1201 = vmatprep.subr.mxu0 0.0
      %1202 = vmatpush1.msra.mxu0 0.0
      %1203 = vmatprep.subr.mxu0 0.0
      %1204 = vmatpush1.msra.mxu0 0.0
      %1205 = vmatprep.subr.mxu0 0.0
      %1206 = vmatpush1.msra.mxu0 0.0
      %1207 = vmatprep.subr.mxu0 0.0
      %1208 = vmatpush1.msra.mxu0 0.0
      %1209 = vmatprep.subr.mxu0 0.0
      %1210 = vmatpush1.msra.mxu0 0.0
      %1211 = vmatprep.subr.mxu0 0.0
      %1212 = vmatpush1.msra.mxu0 0.0
      %1213 = vmatprep.subr.mxu0 0.0
      %1214 = vmatpush1.msra.mxu0 0.0
      %1215 = vmatprep.subr.mxu0 0.0
      %1216 = vmatpush1.msra.mxu0 0.0
      %1217 = vmatprep.subr.mxu0 0.0
      %1218 = vmatpush1.msra.mxu0 0.0
      %1219 = vmatprep.subr.mxu0 0.0
      %1220 = vmatpush1.msra.mxu0 0.0
      %1221 = vmatprep.subr.mxu0 0.0
      %1222 = vmatpush1.msra.mxu0 0.0
      %1223 = vmatprep.subr.mxu0 0.0
      %1224 = vmatpush1.msra.mxu0 0.0
      %1225 = vmatprep.subr.mxu0 0.0
      %1226 = vmatpush1.msra.mxu0 0.0
      %1227 = vmatprep.subr.mxu0 0.0
      %1228 = vmatpush1.msra.mxu0 0.0
      %1229 = vmatprep.subr.mxu0 0.0
      %1230 = vmatpush1.msra.mxu0 0.0
      %1231 = vmatprep.subr.mxu0 0.0
      %1232 = vmatpush1.msra.mxu0 0.0
      %1233 = vmatprep.subr.mxu0 0.0
      %1234 = vmatpush1.msra.mxu0 0.0
      %1235 = vmatprep.subr.mxu0 0.0
      %1236 = vmatpush1.msra.mxu0 0.0
      %1237 = vmatprep.subr.mxu0 0.0
      %1238 = vmatpush1.msra.mxu0 0.0
      %1239 = vmatprep.subr.mxu0 0.0
      %1240 = vmatpush1.msra.mxu0 0.0
      %1241 = vmatprep.subr.mxu0 0.0
      %1242 = vmatpush1.msra.mxu0 0.0
      %1243 = vmatprep.subr.mxu0 0.0
      %1244 = vmatpush1.msra.mxu0 0.0
      %1245 = vmatprep.mubr.f32.mxu0 0.0
      %1246 = vmatmul.mubr.f32.gmra.mrb[0].mxu0 %v1170
      %v1247 = vpop.f32.mrb[0].mxu0
      %v1248 = vadd.f32 0.0, %v1247
      %v1249 = vpop.f32.mrb[0].mxu0
      %1250 = vmatprep.mubr.f32.mxu0 0.0
      %1251 = vmatmul.mubr.f32.gmra.mrb[0].mxu0 %v1173
      %v1252 = vpop.f32.mrb[0].mxu0
      %v1253 = vadd.f32 0.0, %v1252
      %v1254 = vpop.f32.mrb[0].mxu0
      %1255 = vmatprep.mubr.f32.mxu0 0.0
      %1256 = vmatmul.mubr.f32.gmra.mrb[0].mxu0 %v1176
      %v1257 = vpop.f32.mrb[0].mxu0
      %v1258 = vadd.f32 0.0, %v1257
      %v1259 = vpop.f32.mrb[0].mxu0
      %1260 = vmatprep.mubr.f32.mxu0 0.0
      %1261 = vmatmul.mubr.f32.gmra.mrb[0].mxu0 %v1179
      %v1262 = vpop.f32.mrb[0].mxu0
      %v1263 = vadd.f32 0.0, %v1262
      %v1264 = vpop.f32.mrb[0].mxu0
      %1265 = vdwg.mxu0
      %v1266 = vadd.f32 %v1152, %v1248
      %v1267 = vadd.f32 %v1153, %v1253
      %v1268 = vadd.f32 %v1154, %v1258
      %v1269 = vadd.f32 %v1155, %v1263
      %v1271 = vsel %vm215, %v1165, 0
      %v1274 = vsel %vm215, %v1166, 0
      %v1277 = vsel %vm215, %v1167, 0
      %v1280 = vsel %vm215, %v1168, 0
      %1282 = vmatprep.subr.mxu0 0.0
      %1283 = vmatpush1.msra.mxu0 %v1160
      %1284 = vmatprep.subr.mxu0 0.0
      %1285 = vmatpush1.msra.mxu0 0.0
      %1286 = vmatprep.subr.mxu0 0.0
      %1287 = vmatpush1.msra.mxu0 0.0
      %1288 = vmatprep.subr.mxu0 0.0
      %1289 = vmatpush1.msra.mxu0 0.0
      %1290 = vmatprep.subr.mxu0 0.0
      %1291 = vmatpush1.msra.mxu0 0.0
      %1292 = vmatprep.subr.mxu0 0.0
      %1293 = vmatpush1.msra.mxu0 0.0
      %1294 = vmatprep.subr.mxu0 0.0
      %1295 = vmatpush1.msra.mxu0 0.0
      %1296 = vmatprep.subr.mxu0 0.0
      %1297 = vmatpush1.msra.mxu0 0.0
      %1298 = vmatprep.subr.mxu0 0.0
      %1299 = vmatpush1.msra.mxu0 0.0
      %1300 = vmatprep.subr.mxu0 0.0
      %1301 = vmatpush1.msra.mxu0 0.0
      %1302 = vmatprep.subr.mxu0 0.0
      %1303 = vmatpush1.msra.mxu0 0.0
      %1304 = vmatprep.subr.mxu0 0.0
      %1305 = vmatpush1.msra.mxu0 0.0
      %1306 = vmatprep.subr.mxu0 0.0
      %1307 = vmatpush1.msra.mxu0 0.0
      %1308 = vmatprep.subr.mxu0 0.0
      %1309 = vmatpush1.msra.mxu0 0.0
      %1310 = vmatprep.subr.mxu0 0.0
      %1311 = vmatpush1.msra.mxu0 0.0
      %1312 = vmatprep.subr.mxu0 0.0
      %1313 = vmatpush1.msra.mxu0 0.0
      %1314 = vmatprep.subr.mxu0 0.0
      %1315 = vmatpush1.msra.mxu0 0.0
      %1316 = vmatprep.subr.mxu0 0.0
      %1317 = vmatpush1.msra.mxu0 0.0
      %1318 = vmatprep.subr.mxu0 0.0
      %1319 = vmatpush1.msra.mxu0 0.0
      %1320 = vmatprep.subr.mxu0 0.0
      %1321 = vmatpush1.msra.mxu0 0.0
      %1322 = vmatprep.subr.mxu0 0.0
      %1323 = vmatpush1.msra.mxu0 0.0
      %1324 = vmatprep.subr.mxu0 0.0
      %1325 = vmatpush1.msra.mxu0 0.0
      %1326 = vmatprep.subr.mxu0 0.0
      %1327 = vmatpush1.msra.mxu0 0.0
      %1328 = vmatprep.subr.mxu0 0.0
      %1329 = vmatpush1.msra.mxu0 0.0
      %1330 = vmatprep.subr.mxu0 0.0
      %1331 = vmatpush1.msra.mxu0 0.0
      %1332 = vmatprep.subr.mxu0 0.0
      %1333 = vmatpush1.msra.mxu0 0.0
      %1334 = vmatprep.subr.mxu0 0.0
      %1335 = vmatpush1.msra.mxu0 0.0
      %1336 = vmatprep.subr.mxu0 0.0
      %1337 = vmatpush1.msra.mxu0 0.0
      %1338 = vmatprep.subr.mxu0 0.0
      %1339 = vmatpush1.msra.mxu0 0.0
      %1340 = vmatprep.subr.mxu0 0.0
      %1341 = vmatpush1.msra.mxu0 0.0
      %1342 = vmatprep.subr.mxu0 0.0
      %1343 = vmatpush1.msra.mxu0 0.0
      %1344 = vmatprep.subr.mxu0 0.0
      %1345 = vmatpush1.msra.mxu0 0.0
      %1346 = vmatprep.mubr.f32.mxu0 0.0
      %1347 = vmatmul.mubr.f32.gmra.mrb[0].mxu0 %v1271
      %v1348 = vpop.f32.mrb[0].mxu0
      %v1349 = vadd.f32 0.0, %v1348
      %v1350 = vpop.f32.mrb[0].mxu0
      %1351 = vmatprep.mubr.f32.mxu0 0.0
      %1352 = vmatmul.mubr.f32.gmra.mrb[0].mxu0 %v1274
      %v1353 = vpop.f32.mrb[0].mxu0
      %v1354 = vadd.f32 0.0, %v1353
      %v1355 = vpop.f32.mrb[0].mxu0
      %1356 = vmatprep.mubr.f32.mxu0 0.0
      %1357 = vmatmul.mubr.f32.gmra.mrb[0].mxu0 %v1277
      %v1358 = vpop.f32.mrb[0].mxu0
      %v1359 = vadd.f32 0.0, %v1358
      %v1360 = vpop.f32.mrb[0].mxu0
      %1361 = vmatprep.mubr.f32.mxu0 0.0
      %1362 = vmatmul.mubr.f32.gmra.mrb[0].mxu0 %v1280
      %v1363 = vpop.f32.mrb[0].mxu0
      %v1364 = vadd.f32 0.0, %v1363
      %v1365 = vpop.f32.mrb[0].mxu0
      %1366 = vdwg.mxu0
      %v1367 = vadd.f32 %v1266, %v1349
      %v1368 = vadd.f32 %v1267, %v1354
      %v1369 = vadd.f32 %v1268, %v1359
      %v1370 = vadd.f32 %v1269, %v1364
      %v1371 = vmax.f32 %v1367, 0.0
      %v1372 = vmax.f32 %v1368, 0.0
      %v1373 = vmax.f32 %v1369, 0.0
      %v1374 = vmax.f32 %v1370, 0.0
      %v1375 = vld [vmem:[%s182 + $0x120] sm:$0xff]
      %v1376 = vld [vmem:[%s182 + $0x128] sm:$0xff]
      %v1377 = vld [vmem:[%s182 + $0x130] sm:$0xff]
      %v1378 = vld [vmem:[%s182 + $0x138] sm:$0xff]
      %1380 = vset.pattern.permute.xlu0 32
      %1381 = vperm.xlu0 %1380, %v1375
      %v1382 = vpop.permute.xlu0 %1381
      %1385 = vset.pattern.permute.xlu0 32
      %1386 = vperm.xlu0 %1385, %v1376
      %v1387 = vpop.permute.xlu0 %1386
      %1390 = vset.pattern.permute.xlu0 32
      %1391 = vperm.xlu0 %1390, %v1377
      %v1392 = vpop.permute.xlu0 %1391
      %1395 = vset.pattern.permute.xlu0 32
      %1396 = vperm.xlu0 %1395, %v1378
      %v1397 = vpop.permute.xlu0 %1396
      %vm1399 = vcmask 261120
      %v1400 = vsel %vm1399, %v1375, 0
      %v1402 = vsel %vm1399, %v1376, 0
      %v1404 = vsel %vm1399, %v1377, 0
      %v1406 = vsel %vm1399, %v1378, 0
      %1408 = vmatprep.subr.mxu0 0.0
      %1409 = vmatpush1.msra.mxu0 %v1371
      %1410 = vmatprep.subr.mxu0 0.0
      %1411 = vmatpush1.msra.mxu0 %v1372
      %1412 = vmatprep.subr.mxu0 0.0
      %1413 = vmatpush1.msra.mxu0 %v1373
      %1414 = vmatprep.subr.mxu0 0.0
      %1415 = vmatpush1.msra.mxu0 %v1374
      %1416 = vmatprep.subr.mxu0 0.0
      %1417 = vmatpush1.msra.mxu0 0.0
      %1418 = vmatprep.subr.mxu0 0.0
      %1419 = vmatpush1.msra.mxu0 0.0
      %1420 = vmatprep.subr.mxu0 0.0
      %1421 = vmatpush1.msra.mxu0 0.0
      %1422 = vmatprep.subr.mxu0 0.0
      %1423 = vmatpush1.msra.mxu0 0.0
      %1424 = vmatprep.subr.mxu0 0.0
      %1425 = vmatpush1.msra.mxu0 0.0
      %1426 = vmatprep.subr.mxu0 0.0
      %1427 = vmatpush1.msra.mxu0 0.0
      %1428 = vmatprep.subr.mxu0 0.0
      %1429 = vmatpush1.msra.mxu0 0.0
      %1430 = vmatprep.subr.mxu0 0.0
      %1431 = vmatpush1.msra.mxu0 0.0
      %1432 = vmatprep.subr.mxu0 0.0
      %1433 = vmatpush1.msra.mxu0 0.0
      %1434 = vmatprep.subr.mxu0 0.0
      %1435 = vmatpush1.msra.mxu0 0.0
      %1436 = vmatprep.subr.mxu0 0.0
      %1437 = vmatpush1.msra.mxu0 0.0
      %1438 = vmatprep.subr.mxu0 0.0
      %1439 = vmatpush1.msra.mxu0 0.0
      %1440 = vmatprep.subr.mxu0 0.0
      %1441 = vmatpush1.msra.mxu0 0.0
      %1442 = vmatprep.subr.mxu0 0.0
      %1443 = vmatpush1.msra.mxu0 0.0
      %1444 = vmatprep.subr.mxu0 0.0
      %1445 = vmatpush1.msra.mxu0 0.0
      %1446 = vmatprep.subr.mxu0 0.0
      %1447 = vmatpush1.msra.mxu0 0.0
      %1448 = vmatprep.subr.mxu0 0.0
      %1449 = vmatpush1.msra.mxu0 0.0
      %1450 = vmatprep.subr.mxu0 0.0
      %1451 = vmatpush1.msra.mxu0 0.0
      %1452 = vmatprep.subr.mxu0 0.0
      %1453 = vmatpush1.msra.mxu0 0.0
      %1454 = vmatprep.subr.mxu0 0.0
      %1455 = vmatpush1.msra.mxu0 0.0
      %1456 = vmatprep.subr.mxu0 0.0
      %1457 = vmatpush1.msra.mxu0 0.0
      %1458 = vmatprep.subr.mxu0 0.0
      %1459 = vmatpush1.msra.mxu0 0.0
      %1460 = vmatprep.subr.mxu0 0.0
      %1461 = vmatpush1.msra.mxu0 0.0
      %1462 = vmatprep.subr.mxu0 0.0
      %1463 = vmatpush1.msra.mxu0 0.0
      %1464 = vmatprep.subr.mxu0 0.0
      %1465 = vmatpush1.msra.mxu0 0.0
      %1466 = vmatprep.subr.mxu0 0.0
      %1467 = vmatpush1.msra.mxu0 0.0
      %1468 = vmatprep.subr.mxu0 0.0
      %1469 = vmatpush1.msra.mxu0 0.0
      %1470 = vmatprep.subr.mxu0 0.0
      %1471 = vmatpush1.msra.mxu0 0.0
      %1472 = vmatprep.mubr.f32.mxu0 0.0
      %1473 = vmatmul.mubr.f32.gmra.mrb[0].mxu0 %v1400
      %v1474 = vpop.f32.mrb[0].mxu0
      %v1475 = vadd.f32 %v1382, %v1474
      %v1476 = vpop.f32.mrb[0].mxu0
      %1477 = vmatprep.mubr.f32.mxu0 0.0
      %1478 = vmatmul.mubr.f32.gmra.mrb[0].mxu0 %v1402
      %v1479 = vpop.f32.mrb[0].mxu0
      %v1480 = vadd.f32 %v1387, %v1479
      %v1481 = vpop.f32.mrb[0].mxu0
      %1482 = vmatprep.mubr.f32.mxu0 0.0
      %1483 = vmatmul.mubr.f32.gmra.mrb[0].mxu0 %v1404
      %v1484 = vpop.f32.mrb[0].mxu0
      %v1485 = vadd.f32 %v1392, %v1484
      %v1486 = vpop.f32.mrb[0].mxu0
      %1487 = vmatprep.mubr.f32.mxu0 0.0
      %1488 = vmatmul.mubr.f32.gmra.mrb[0].mxu0 %v1406
      %v1489 = vpop.f32.mrb[0].mxu0
      %v1490 = vadd.f32 %v1397, %v1489
      %v1491 = vpop.f32.mrb[0].mxu0
      %1492 = vdwg.mxu0
      %v1493 = vmax.f32 %v1475, 0.0
      %v1494 = vmax.f32 %v1480, 0.0
      %v1495 = vmax.f32 %v1485, 0.0
      %v1496 = vmax.f32 %v1490, 0.0
      %v1497 = vld [vmem:[%s182 + $0x140] sm:$0xff]
      %1499 = vset.pattern.permute.xlu0 32
      %1500 = vperm.xlu0 %1499, %v1497
      %v1501 = vpop.permute.xlu0 %1500
      %v1503 = vsel %vm1399, %v1497, 0
      %1505 = vmatprep.subr.mxu0 0.0
      %1506 = vmatpush1.msra.mxu0 %v1493
      %1507 = vmatprep.subr.mxu0 0.0
      %1508 = vmatpush1.msra.mxu0 %v1494
      %1509 = vmatprep.subr.mxu0 0.0
      %1510 = vmatpush1.msra.mxu0 %v1495
      %1511 = vmatprep.subr.mxu0 0.0
      %1512 = vmatpush1.msra.mxu0 %v1496
      %1513 = vmatprep.subr.mxu0 0.0
      %1514 = vmatpush1.msra.mxu0 0.0
      %1515 = vmatprep.subr.mxu0 0.0
      %1516 = vmatpush1.msra.mxu0 0.0
      %1517 = vmatprep.subr.mxu0 0.0
      %1518 = vmatpush1.msra.mxu0 0.0
      %1519 = vmatprep.subr.mxu0 0.0
      %1520 = vmatpush1.msra.mxu0 0.0
      %1521 = vmatprep.subr.mxu0 0.0
      %1522 = vmatpush1.msra.mxu0 0.0
      %1523 = vmatprep.subr.mxu0 0.0
      %1524 = vmatpush1.msra.mxu0 0.0
      %1525 = vmatprep.subr.mxu0 0.0
      %1526 = vmatpush1.msra.mxu0 0.0
      %1527 = vmatprep.subr.mxu0 0.0
      %1528 = vmatpush1.msra.mxu0 0.0
      %1529 = vmatprep.subr.mxu0 0.0
      %1530 = vmatpush1.msra.mxu0 0.0
      %1531 = vmatprep.subr.mxu0 0.0
      %1532 = vmatpush1.msra.mxu0 0.0
      %1533 = vmatprep.subr.mxu0 0.0
      %1534 = vmatpush1.msra.mxu0 0.0
      %1535 = vmatprep.subr.mxu0 0.0
      %1536 = vmatpush1.msra.mxu0 0.0
      %1537 = vmatprep.subr.mxu0 0.0
      %1538 = vmatpush1.msra.mxu0 0.0
      %1539 = vmatprep.subr.mxu0 0.0
      %1540 = vmatpush1.msra.mxu0 0.0
      %1541 = vmatprep.subr.mxu0 0.0
      %1542 = vmatpush1.msra.mxu0 0.0
      %1543 = vmatprep.subr.mxu0 0.0
      %1544 = vmatpush1.msra.mxu0 0.0
      %1545 = vmatprep.subr.mxu0 0.0
      %1546 = vmatpush1.msra.mxu0 0.0
      %1547 = vmatprep.subr.mxu0 0.0
      %1548 = vmatpush1.msra.mxu0 0.0
      %1549 = vmatprep.subr.mxu0 0.0
      %1550 = vmatpush1.msra.mxu0 0.0
      %1551 = vmatprep.subr.mxu0 0.0
      %1552 = vmatpush1.msra.mxu0 0.0
      %1553 = vmatprep.subr.mxu0 0.0
      %1554 = vmatpush1.msra.mxu0 0.0
      %1555 = vmatprep.subr.mxu0 0.0
      %1556 = vmatpush1.msra.mxu0 0.0
      %1557 = vmatprep.subr.mxu0 0.0
      %1558 = vmatpush1.msra.mxu0 0.0
      %1559 = vmatprep.subr.mxu0 0.0
      %1560 = vmatpush1.msra.mxu0 0.0
      %1561 = vmatprep.subr.mxu0 0.0
      %1562 = vmatpush1.msra.mxu0 0.0
      %1563 = vmatprep.subr.mxu0 0.0
      %1564 = vmatpush1.msra.mxu0 0.0
      %1565 = vmatprep.subr.mxu0 0.0
      %1566 = vmatpush1.msra.mxu0 0.0
      %1567 = vmatprep.subr.mxu0 0.0
      %1568 = vmatpush1.msra.mxu0 0.0
      %1569 = vmatprep.mubr.f32.mxu0 0.0
      %1570 = vmatmul.mubr.f32.gmra.mrb[0].mxu0 %v1503
      %v1571 = vpop.f32.mrb[0].mxu0
      %v1572 = vadd.f32 %v1501, %v1571
      %v1573 = vpop.f32.mrb[0].mxu0
      %1574 = vdwg.mxu0
      %v1575 = vtanh.pop %v1572
      %1576 = vst [vmem:[%s189] sm:$0xff] %v1575
      %p1577 = scmp.lt.s32.totalorder %s17, 1
      %s1578 = scalar_select %p1577, %s17, 1
      %p1579 = scmp.lt.s32.totalorder %s18, 0
      %s1580 = scalar_select %p1579, %s18, 0
      %s1581 = sadd.s32 %s1580, %s1578
      %s1582 = smul.addr %s1581, 8
      %s1583 = scalar_lea.vmem %s2, %s1582
      // Predicated region
      $region29: #{multi_displacement_forward.1} parent=27 // pred_check
        %p1584 = pneg %p99
      $region30: #{multi_displacement_forward.1} parent=27 // pred_check_branch
        %1586 = sbr.rel (%p1584) target = $region32
      $region31: #{multi_displacement_forward.1} parent=27 // pred_region
        _
      $region32: #{multi_displacement_forward.1} parent=27 // pred_fallthru
        _
    $region28: #{multi_displacement_forward.1} parent=5 // pred_fallthru
      _
    %p1587 = scmp.le.s32.totalorder 2, %s8
    // Predicated region
    $region33: #{multi_displacement_forward.1} parent=5 // pred_check
      %p1588 = pneg %p1587
    $region34: #{multi_displacement_forward.1} parent=5 // pred_check_branch
      %1590 = sbr.rel (%p1588) target = $region36
    $region35: #{multi_displacement_forward.1} parent=5 // pred_region
      %s1591 = ssub.s32 %s8, 2
      // Predicated region
      $region37: #{multi_displacement_forward.1} parent=35 // pred_check
        %p1592 = pneg %p105
      $region38: #{multi_displacement_forward.1} parent=35 // pred_check_branch
        %1594 = sbr.rel (%p1592) target = $region40
      $region39: #{multi_displacement_forward.1} parent=35 // pred_region
        %p1595 = scmp.lt.s32.totalorder %s19, 1
        %s1596 = scalar_select %p1595, %s19, 1
        %p1597 = scmp.lt.s32.totalorder %s20, 0
        %s1598 = scalar_select %p1597, %s20, 0
        %s1599 = sadd.s32 %s1598, %s1596
        %s1600 = smul.addr %s1599, 8
        %s1601 = scalar_lea.vmem %s2, %s1600
      $region40: #{multi_displacement_forward.1} parent=35 // pred_fallthru
        _
    $region36: #{multi_displacement_forward.1} parent=5 // pred_fallthru
      _
  $region6: #{multi_displacement_forward.1} parent=0 // loop_footer
    %s12 = sadd.s32 1, %s8
  $region7: #{multi_displacement_forward.1} parent=0 // loop_footer_branch
    %7 = sbr.rel target = $region3
  $region8: #{multi_displacement_forward.1} parent=0 // loop_exit
    _

</llo_original>
